<compile_context>
chip_gen: v7x
topology: tpu7x:2x2x1
jax: 0.10.0
libtpu: 0.0.40
codegen_flags: <defaults>
</compile_context>

<pallas_src>
from functools import partial

import jax
import jax.numpy as jnp
from jax.experimental import pallas as pl
from jax.experimental.pallas import tpu as pltpu


def _round_up(n, m):
    return ((n + m - 1) // m) * m


def _act_dtype_for_device():
    """bf16 EUP (exp) exists on v6e / v7x; keep f32 elsewhere (v5e and older)."""
    try:
        kind = jax.devices()[0].device_kind.lower()
    except Exception:
        kind = ""
    if "v6" in kind or "v7" in kind or "7x" in kind:
        return jnp.bfloat16
    return jnp.float32


def _sigmoid(z_f32, act_dtype):
    # sigmoid(z) = 1 / (1 + exp(-z)): exp on the EUP (bf16 where supported), divide replaced
    # by an approximate EUP reciprocal. Returns f32.
    e = jnp.exp(-(z_f32.astype(act_dtype)))
    return pl.reciprocal(1.0 + e.astype(jnp.float32), approx=True)


def _discriminator_kernel(x_ref, w1_ref, b1_ref, w2_ref, b2_ref, w3_ref, b3_ref, o_ref,
                          *, act_dtype):
    # In-kernel cast of the streamed x tile to the MXU dtype (hides under DMA/MXU).
    x = x_ref[...].astype(w1_ref.dtype)
    # Layer 1: bf16 MXU pass, f32 accumulate, f32 bias add, EUP sigmoid.
    h = _sigmoid(jnp.dot(x, w1_ref[...], preferred_element_type=jnp.float32)
                 + b1_ref[...], act_dtype)
    # Layer 2
    h = _sigmoid(jnp.dot(h.astype(w2_ref.dtype), w2_ref[...],
                         preferred_element_type=jnp.float32) + b2_ref[...], act_dtype)
    # Layer 3 (output padded to 128 lanes -> full-width MXU pass + lane-dense store)
    h = _sigmoid(jnp.dot(h.astype(w3_ref.dtype), w3_ref[...],
                         preferred_element_type=jnp.float32) + b3_ref[...], act_dtype)
    o_ref[...] = h.astype(o_ref.dtype)       # bf16 store: halves the largest HBM stream


def prepare_params(params, compute_dtype=jnp.bfloat16):
    """One-time pad + cast of the weights. Call once and reuse for every forward call."""
    w1, b1, w2, b2, w3, b3 = (params[k] for k in ("w1", "b1", "w2", "b2", "w3", "b3"))
    In, H = w1.shape
    Out = w3.shape[1]
    In_p, H_p, Out_p = (_round_up(d, 128) for d in (In, H, Out))

    w1p = jnp.zeros((In_p, H_p), compute_dtype).at[:In, :H].set(w1.astype(compute_dtype))
    b1p = jnp.zeros((1, H_p), jnp.float32).at[:, :H].set(b1.astype(jnp.float32))
    w2p = jnp.zeros((H_p, H_p), compute_dtype).at[:H, :H].set(w2.astype(compute_dtype))
    b2p = jnp.zeros((1, H_p), jnp.float32).at[:, :H].set(b2.astype(jnp.float32))
    w3p = jnp.zeros((H_p, Out_p), compute_dtype).at[:H, :Out].set(w3.astype(compute_dtype))
    b3p = jnp.zeros((1, Out_p), jnp.float32).at[:, :Out].set(b3.astype(jnp.float32))
    return dict(w1=w1p, b1=b1p, w2=w2p, b2=b2p, w3=w3p, b3=b3p,
                In=In, H=H, Out=Out, In_p=In_p, H_p=H_p, Out_p=Out_p)


def _resident_spec(shape, weight_buffers):
    # Constant block index -> the block stays VMEM-resident across the whole grid.
    if weight_buffers is None:
        return pl.BlockSpec(shape, lambda i: (0, 0))
    # Single-buffer resident weights: double-buffering a never-changing block wastes VMEM.
    return pl.BlockSpec(shape, lambda i: (0, 0), pipeline_mode=pl.Buffered(weight_buffers))


def _vmem_limit_bytes(TB, In_p, H_p, Out_p, weight_buffers):
    wb = 2 if weight_buffers is None else weight_buffers
    weights = (In_p * H_p + H_p * H_p + H_p * Out_p) * 2 * wb   # bf16 weights
    biases = (2 * H_p + Out_p) * 4 * wb                         # f32 biases
    x_tiles = TB * In_p * 4 * 2                                 # f32 x, double-buffered
    out_tiles = TB * Out_p * 2 * 2                              # bf16 out, double-buffered
    interm = TB * H_p * 4 * 4                                   # f32 hidden/exp temporaries
    est = weights + biases + x_tiles + out_tiles + interm
    return int(min(max(2 * est, 32 * 2 ** 20), 64 * 2 ** 20))


def _forward_padded(xp, pp, TB, act_dtype, weight_buffers):
    B_p, In_p = xp.shape
    H_p, Out_p = pp["H_p"], pp["Out_p"]
    grid = (B_p // TB,)
    return pl.pallas_call(
        partial(_discriminator_kernel, act_dtype=act_dtype),
        out_shape=jax.ShapeDtypeStruct((B_p, Out_p), jnp.bfloat16),
        grid_spec=pl.GridSpec(
            grid=grid,
            in_specs=[
                pl.BlockSpec((TB, In_p), lambda i: (i, 0)),     # streamed batch tiles
                _resident_spec((In_p, H_p), weight_buffers),
                _resident_spec((1, H_p), weight_buffers),
                _resident_spec((H_p, H_p), weight_buffers),
                _resident_spec((1, H_p), weight_buffers),
                _resident_spec((H_p, Out_p), weight_buffers),
                _resident_spec((1, Out_p), weight_buffers),
            ],
            out_specs=pl.BlockSpec((TB, Out_p), lambda i: (i, 0)),
        ),
        compiler_params=pltpu.CompilerParams(
            dimension_semantics=("parallel",),                  # megacore-shard the batch axis
            vmem_limit_bytes=_vmem_limit_bytes(TB, In_p, H_p, Out_p, weight_buffers),
        ),
    )(xp, pp["w1"], pp["b1"], pp["w2"], pp["b2"], pp["w3"], pp["b3"])


_CONFIG_IDX = [0]   # first working (weight_buffers, act_dtype) config, discovered once


def discriminator_forward(x, prepared, *, block_b=1024):
    """x: (B, input_size) f32 (or bf16). prepared: prepare_params(...). Returns (B, Out) f32."""
    B, In = x.shape
    assert In == prepared["In"], (In, prepared["In"])
    In_p, Out_p, Out = prepared["In_p"], prepared["Out_p"], prepared["Out"]

    # Batch tile: big enough to amortize the ~0.35us per-grid-step overhead, multiple of 16
    # (bf16 sublane tile), shrunk only to keep >= 4 grid steps when B allows.
    TB = min(_round_up(block_b, 16), _round_up(B, 16))
    while TB > 256 and _round_up(B, TB) // TB < 4:
        TB //= 2
    TB = _round_up(TB, 16)
    B_p = _round_up(B, TB)

    # No wrapper-side cast of x; zero-pad only if shapes require it.
    if (B_p, In_p) != (B, In):
        xp = jnp.zeros((B_p, In_p), x.dtype).at[:B, :In].set(x)
    else:
        xp = x

    act_pref = _act_dtype_for_device()
    configs = ((1, act_pref), (None, act_pref), (None, jnp.float32))
    idx = _CONFIG_IDX[0]
    while True:
        weight_buffers, act_dtype = configs[idx]
        try:
            out = _forward_padded(xp, prepared, TB, act_dtype, weight_buffers)
            _CONFIG_IDX[0] = idx
            break
        except Exception:
            if idx + 1 >= len(configs):
                raise
            idx += 1   # degrade gracefully (e.g. Buffered(1) unsupported / no bf16 EUP)

    return out[:B, :Out].astype(jnp.float32)


def init_params(key, input_size, hidden_size, output_size):
    """Deterministic init mimicking nn.Linear's U(-1/sqrt(fan_in), 1/sqrt(fan_in))."""
    ks = jax.random.split(key, 6)

    def linear(kw, kb, fan_in, fan_out):
        bound = 1.0 / jnp.sqrt(fan_in)
        w = jax.random.uniform(kw, (fan_in, fan_out), jnp.float32, -bound, bound)  # == torch W.T
        b = jax.random.uniform(kb, (1, fan_out), jnp.float32, -bound, bound)
        return w, b

    w1, b1 = linear(ks[0], ks[1], input_size, hidden_size)
    w2, b2 = linear(ks[2], ks[3], hidden_size, hidden_size)
    w3, b3 = linear(ks[4], ks[5], hidden_size, output_size)
    return dict(w1=w1, b1=b1, w2=w2, b2=b2, w3=w3, b3=b3)


def _reference_f32(x, p):
    h1 = jax.nn.sigmoid(x @ p["w1"] + p["b1"])
    h2 = jax.nn.sigmoid(h1 @ p["w2"] + p["b2"])
    return jax.nn.sigmoid(h2 @ p["w3"] + p["b3"])


if __name__ == "__main__":
    # Small shapes consistent with the module: Discriminator(input_size, hidden, output)
    batch, input_size, hidden_size, output_size = 2, 16, 32, 1

    key = jax.random.PRNGKey(0)
    kx, kp = jax.random.split(key)
    x = jax.random.normal(kx, (batch, input_size), dtype=jnp.float32)
    params = init_params(kp, input_size, hidden_size, output_size)

    prepared = prepare_params(params)        # one-time weight pad + bf16 cast (reused per call)
    out = discriminator_forward(x, prepared)
    out = jax.block_until_ready(out)

    ref = _reference_f32(x, params)
    assert out.shape == (batch, output_size)
    # bf16 weights/activations on the MXU path + bf16 output store -> loosened tolerance.
    assert jnp.allclose(out, ref, atol=5e-2, rtol=5e-2), (out, ref)

    print("KERNEL_OK")
</pallas_src>

<mosaic_0001>
module attributes {stable_mosaic.version = 11 : i64} {
  func.func @_discriminator_kernel(%arg0: i32, %arg1: memref<16x128xf32, #tpu.memory_space<vmem>>, %arg2: memref<128x128xbf16, #tpu.memory_space<vmem>>, %arg3: memref<1x128xf32, #tpu.memory_space<vmem>>, %arg4: memref<128x128xbf16, #tpu.memory_space<vmem>>, %arg5: memref<1x128xf32, #tpu.memory_space<vmem>>, %arg6: memref<128x128xbf16, #tpu.memory_space<vmem>>, %arg7: memref<1x128xf32, #tpu.memory_space<vmem>>, %arg8: memref<16x128xbf16, #tpu.memory_space<vmem>>) attributes {dimension_semantics = [#tpu.dimension_semantics<parallel>], iteration_bounds = array<i64: 1>, scalar_prefetch = 0 : i64, scratch_operands = 0 : i64, tpu.core_type = #tpu.core_type<tc>, window_params = [{transform_indices = @transform_0, window_bounds = array<i64: 16, 128>}, {pipeline_mode = #tpu.pipeline_mode<synchronous>, transform_indices = @transform_1, window_bounds = array<i64: 128, 128>}, {pipeline_mode = #tpu.pipeline_mode<synchronous>, transform_indices = @transform_2, window_bounds = array<i64: 1, 128>}, {pipeline_mode = #tpu.pipeline_mode<synchronous>, transform_indices = @transform_3, window_bounds = array<i64: 128, 128>}, {pipeline_mode = #tpu.pipeline_mode<synchronous>, transform_indices = @transform_4, window_bounds = array<i64: 1, 128>}, {pipeline_mode = #tpu.pipeline_mode<synchronous>, transform_indices = @transform_5, window_bounds = array<i64: 128, 128>}, {pipeline_mode = #tpu.pipeline_mode<synchronous>, transform_indices = @transform_6, window_bounds = array<i64: 1, 128>}, {transform_indices = @transform_7, window_bounds = array<i64: 16, 128>}]} {
    %c0 = arith.constant 0 : index
    %c0_0 = arith.constant 0 : index
    %0 = vector.load %arg1[%c0, %c0_0] : memref<16x128xf32, #tpu.memory_space<vmem>>, vector<16x128xf32>
    %1 = arith.truncf %0 : vector<16x128xf32> to vector<16x128xbf16>
    %c0_1 = arith.constant 0 : index
    %c0_2 = arith.constant 0 : index
    %2 = vector.load %arg2[%c0_1, %c0_2] : memref<128x128xbf16, #tpu.memory_space<vmem>>, vector<128x128xbf16>
    %cst = arith.constant dense<0.000000e+00> : vector<16x128xf32>
    %3 = tpu.matmul %1, %2, %cst {dimension_numbers = #tpu.dot_dimension_numbers<[1], [0], [0], [1], [0, 0, 1, 1], [], []>} : vector<16x128xbf16>, vector<128x128xbf16>, vector<16x128xf32> -> vector<16x128xf32>
    %c0_3 = arith.constant 0 : index
    %c0_4 = arith.constant 0 : index
    %4 = vector.load %arg3[%c0_3, %c0_4] : memref<1x128xf32, #tpu.memory_space<vmem>>, vector<1x128xf32>
    %5 = vector.broadcast %4 : vector<1x128xf32> to vector<16x128xf32>
    %6 = arith.addf %3, %5 : vector<16x128xf32>
    %cst_5 = arith.constant 0.000000e+00 : f32
    %7 = vector.broadcast %cst_5 : f32 to vector<16x128xf32>
    %8 = arith.subf %7, %6 : vector<16x128xf32>
    %9 = math.exp %8 : vector<16x128xf32>
    %cst_6 = arith.constant 1.000000e+00 : f32
    %10 = vector.broadcast %cst_6 : f32 to vector<16x128xf32>
    %11 = arith.addf %10, %9 : vector<16x128xf32>
    %12 = tpu.reciprocal %11 {approx = true} : vector<16x128xf32> -> vector<16x128xf32>
    %13 = arith.truncf %12 : vector<16x128xf32> to vector<16x128xbf16>
    %c0_7 = arith.constant 0 : index
    %c0_8 = arith.constant 0 : index
    %14 = vector.load %arg4[%c0_7, %c0_8] : memref<128x128xbf16, #tpu.memory_space<vmem>>, vector<128x128xbf16>
    %cst_9 = arith.constant dense<0.000000e+00> : vector<16x128xf32>
    %15 = tpu.matmul %13, %14, %cst_9 {dimension_numbers = #tpu.dot_dimension_numbers<[1], [0], [0], [1], [0, 0, 1, 1], [], []>} : vector<16x128xbf16>, vector<128x128xbf16>, vector<16x128xf32> -> vector<16x128xf32>
    %c0_10 = arith.constant 0 : index
    %c0_11 = arith.constant 0 : index
    %16 = vector.load %arg5[%c0_10, %c0_11] : memref<1x128xf32, #tpu.memory_space<vmem>>, vector<1x128xf32>
    %17 = vector.broadcast %16 : vector<1x128xf32> to vector<16x128xf32>
    %18 = arith.addf %15, %17 : vector<16x128xf32>
    %cst_12 = arith.constant 0.000000e+00 : f32
    %19 = vector.broadcast %cst_12 : f32 to vector<16x128xf32>
    %20 = arith.subf %19, %18 : vector<16x128xf32>
    %21 = math.exp %20 : vector<16x128xf32>
    %cst_13 = arith.constant 1.000000e+00 : f32
    %22 = vector.broadcast %cst_13 : f32 to vector<16x128xf32>
    %23 = arith.addf %22, %21 : vector<16x128xf32>
    %24 = tpu.reciprocal %23 {approx = true} : vector<16x128xf32> -> vector<16x128xf32>
    %25 = arith.truncf %24 : vector<16x128xf32> to vector<16x128xbf16>
    %c0_14 = arith.constant 0 : index
    %c0_15 = arith.constant 0 : index
    %26 = vector.load %arg6[%c0_14, %c0_15] : memref<128x128xbf16, #tpu.memory_space<vmem>>, vector<128x128xbf16>
    %cst_16 = arith.constant dense<0.000000e+00> : vector<16x128xf32>
    %27 = tpu.matmul %25, %26, %cst_16 {dimension_numbers = #tpu.dot_dimension_numbers<[1], [0], [0], [1], [0, 0, 1, 1], [], []>} : vector<16x128xbf16>, vector<128x128xbf16>, vector<16x128xf32> -> vector<16x128xf32>
    %c0_17 = arith.constant 0 : index
    %c0_18 = arith.constant 0 : index
    %28 = vector.load %arg7[%c0_17, %c0_18] : memref<1x128xf32, #tpu.memory_space<vmem>>, vector<1x128xf32>
    %29 = vector.broadcast %28 : vector<1x128xf32> to vector<16x128xf32>
    %30 = arith.addf %27, %29 : vector<16x128xf32>
    %cst_19 = arith.constant 0.000000e+00 : f32
    %31 = vector.broadcast %cst_19 : f32 to vector<16x128xf32>
    %32 = arith.subf %31, %30 : vector<16x128xf32>
    %33 = math.exp %32 : vector<16x128xf32>
    %cst_20 = arith.constant 1.000000e+00 : f32
    %34 = vector.broadcast %cst_20 : f32 to vector<16x128xf32>
    %35 = arith.addf %34, %33 : vector<16x128xf32>
    %36 = tpu.reciprocal %35 {approx = true} : vector<16x128xf32> -> vector<16x128xf32>
    %37 = arith.truncf %36 : vector<16x128xf32> to vector<16x128xbf16>
    %c0_21 = arith.constant 0 : index
    %c0_22 = arith.constant 0 : index
    %38 = vector.load %arg8[%c0_21, %c0_22] : memref<16x128xbf16, #tpu.memory_space<vmem>>, vector<16x128xbf16>
    tpu.vector_store %arg8[%c0_21, %c0_22], %37 {strides = array<i32>} : memref<16x128xbf16, #tpu.memory_space<vmem>>, vector<16x128xbf16>,
    return
  }
  func.func @transform_0(%arg0: i32) -> (i32, i32) {
    %c0_i32 = arith.constant 0 : i32
    %c0_i32_0 = arith.constant 0 : i32
    return %arg0, %c0_i32 : i32, i32
  }
  func.func @transform_1(%arg0: i32) -> (i32, i32) {
    %c0_i32 = arith.constant 0 : i32
    %c0_i32_0 = arith.constant 0 : i32
    %c0_i32_1 = arith.constant 0 : i32
    return %c0_i32, %c0_i32_0 : i32, i32
  }
  func.func @transform_2(%arg0: i32) -> (i32, i32) {
    %c0_i32 = arith.constant 0 : i32
    %c0_i32_0 = arith.constant 0 : i32
    %c0_i32_1 = arith.constant 0 : i32
    return %c0_i32, %c0_i32_0 : i32, i32
  }
  func.func @transform_3(%arg0: i32) -> (i32, i32) {
    %c0_i32 = arith.constant 0 : i32
    %c0_i32_0 = arith.constant 0 : i32
    %c0_i32_1 = arith.constant 0 : i32
    return %c0_i32, %c0_i32_0 : i32, i32
  }
  func.func @transform_4(%arg0: i32) -> (i32, i32) {
    %c0_i32 = arith.constant 0 : i32
    %c0_i32_0 = arith.constant 0 : i32
    %c0_i32_1 = arith.constant 0 : i32
    return %c0_i32, %c0_i32_0 : i32, i32
  }
  func.func @transform_5(%arg0: i32) -> (i32, i32) {
    %c0_i32 = arith.constant 0 : i32
    %c0_i32_0 = arith.constant 0 : i32
    %c0_i32_1 = arith.constant 0 : i32
    return %c0_i32, %c0_i32_0 : i32, i32
  }
  func.func @transform_6(%arg0: i32) -> (i32, i32) {
    %c0_i32 = arith.constant 0 : i32
    %c0_i32_0 = arith.constant 0 : i32
    %c0_i32_1 = arith.constant 0 : i32
    return %c0_i32, %c0_i32_0 : i32, i32
  }
  func.func @transform_7(%arg0: i32) -> (i32, i32) {
    %c0_i32 = arith.constant 0 : i32
    %c0_i32_0 = arith.constant 0 : i32
    return %arg0, %c0_i32 : i32, i32
  }
}

module attributes {stable_mosaic.version = 11 : i64} {
  func.func @_discriminator_kernel(%arg0: i32, %arg1: memref<16x128xf32, #tpu.memory_space<vmem>>, %arg2: memref<128x128xbf16, #tpu.memory_space<vmem>>, %arg3: memref<1x128xf32, #tpu.memory_space<vmem>>, %arg4: memref<128x128xbf16, #tpu.memory_space<vmem>>, %arg5: memref<1x128xf32, #tpu.memory_space<vmem>>, %arg6: memref<128x128xbf16, #tpu.memory_space<vmem>>, %arg7: memref<1x128xf32, #tpu.memory_space<vmem>>, %arg8: memref<16x128xbf16, #tpu.memory_space<vmem>>) attributes {dimension_semantics = [#tpu.dimension_semantics<parallel>], iteration_bounds = array<i64: 1>, scalar_prefetch = 0 : i64, scratch_operands = 0 : i64, tpu.core_type = #tpu.core_type<tc>, window_params = [{transform_indices = @transform_0, window_bounds = array<i64: 16, 128>}, {pipeline_mode = #tpu.pipeline_mode<synchronous>, transform_indices = @transform_1, window_bounds = array<i64: 128, 128>}, {pipeline_mode = #tpu.pipeline_mode<synchronous>, transform_indices = @transform_2, window_bounds = array<i64: 1, 128>}, {pipeline_mode = #tpu.pipeline_mode<synchronous>, transform_indices = @transform_3, window_bounds = array<i64: 128, 128>}, {pipeline_mode = #tpu.pipeline_mode<synchronous>, transform_indices = @transform_4, window_bounds = array<i64: 1, 128>}, {pipeline_mode = #tpu.pipeline_mode<synchronous>, transform_indices = @transform_5, window_bounds = array<i64: 128, 128>}, {pipeline_mode = #tpu.pipeline_mode<synchronous>, transform_indices = @transform_6, window_bounds = array<i64: 1, 128>}, {transform_indices = @transform_7, window_bounds = array<i64: 16, 128>}]} {
    %c0 = arith.constant 0 : index
    %c0_0 = arith.constant 0 : index
    %0 = vector.load %arg1[%c0, %c0_0] : memref<16x128xf32, #tpu.memory_space<vmem>>, vector<16x128xf32>
    %1 = arith.truncf %0 : vector<16x128xf32> to vector<16x128xbf16>
    %c0_1 = arith.constant 0 : index
    %c0_2 = arith.constant 0 : index
    %2 = vector.load %arg2[%c0_1, %c0_2] : memref<128x128xbf16, #tpu.memory_space<vmem>>, vector<128x128xbf16>
    %cst = arith.constant dense<0.000000e+00> : vector<16x128xf32>
    %3 = tpu.matmul %1, %2, %cst {dimension_numbers = #tpu.dot_dimension_numbers<[1], [0], [0], [1], [0, 0, 1, 1], [], []>} : vector<16x128xbf16>, vector<128x128xbf16>, vector<16x128xf32> -> vector<16x128xf32>
    %c0_3 = arith.constant 0 : index
    %c0_4 = arith.constant 0 : index
    %4 = vector.load %arg3[%c0_3, %c0_4] : memref<1x128xf32, #tpu.memory_space<vmem>>, vector<1x128xf32>
    %5 = vector.broadcast %4 : vector<1x128xf32> to vector<16x128xf32>
    %6 = arith.addf %3, %5 : vector<16x128xf32>
    %cst_5 = arith.constant 0.000000e+00 : f32
    %7 = vector.broadcast %cst_5 : f32 to vector<16x128xf32>
    %8 = arith.subf %7, %6 : vector<16x128xf32>
    %9 = math.exp %8 : vector<16x128xf32>
    %cst_6 = arith.constant 1.000000e+00 : f32
    %10 = vector.broadcast %cst_6 : f32 to vector<16x128xf32>
    %11 = arith.addf %10, %9 : vector<16x128xf32>
    %12 = tpu.reciprocal %11 {approx = true} : vector<16x128xf32> -> vector<16x128xf32>
    %13 = arith.truncf %12 : vector<16x128xf32> to vector<16x128xbf16>
    %c0_7 = arith.constant 0 : index
    %c0_8 = arith.constant 0 : index
    %14 = vector.load %arg4[%c0_7, %c0_8] : memref<128x128xbf16, #tpu.memory_space<vmem>>, vector<128x128xbf16>
    %cst_9 = arith.constant dense<0.000000e+00> : vector<16x128xf32>
    %15 = tpu.matmul %13, %14, %cst_9 {dimension_numbers = #tpu.dot_dimension_numbers<[1], [0], [0], [1], [0, 0, 1, 1], [], []>} : vector<16x128xbf16>, vector<128x128xbf16>, vector<16x128xf32> -> vector<16x128xf32>
    %c0_10 = arith.constant 0 : index
    %c0_11 = arith.constant 0 : index
    %16 = vector.load %arg5[%c0_10, %c0_11] : memref<1x128xf32, #tpu.memory_space<vmem>>, vector<1x128xf32>
    %17 = vector.broadcast %16 : vector<1x128xf32> to vector<16x128xf32>
    %18 = arith.addf %15, %17 : vector<16x128xf32>
    %cst_12 = arith.constant 0.000000e+00 : f32
    %19 = vector.broadcast %cst_12 : f32 to vector<16x128xf32>
    %20 = arith.subf %19, %18 : vector<16x128xf32>
    %21 = math.exp %20 : vector<16x128xf32>
    %cst_13 = arith.constant 1.000000e+00 : f32
    %22 = vector.broadcast %cst_13 : f32 to vector<16x128xf32>
    %23 = arith.addf %22, %21 : vector<16x128xf32>
    %24 = tpu.reciprocal %23 {approx = true} : vector<16x128xf32> -> vector<16x128xf32>
    %25 = arith.truncf %24 : vector<16x128xf32> to vector<16x128xbf16>
    %c0_14 = arith.constant 0 : index
    %c0_15 = arith.constant 0 : index
    %26 = vector.load %arg6[%c0_14, %c0_15] : memref<128x128xbf16, #tpu.memory_space<vmem>>, vector<128x128xbf16>
    %cst_16 = arith.constant dense<0.000000e+00> : vector<16x128xf32>
    %27 = tpu.matmul %25, %26, %cst_16 {dimension_numbers = #tpu.dot_dimension_numbers<[1], [0], [0], [1], [0, 0, 1, 1], [], []>} : vector<16x128xbf16>, vector<128x128xbf16>, vector<16x128xf32> -> vector<16x128xf32>
    %c0_17 = arith.constant 0 : index
    %c0_18 = arith.constant 0 : index
    %28 = vector.load %arg7[%c0_17, %c0_18] : memref<1x128xf32, #tpu.memory_space<vmem>>, vector<1x128xf32>
    %29 = vector.broadcast %28 : vector<1x128xf32> to vector<16x128xf32>
    %30 = arith.addf %27, %29 : vector<16x128xf32>
    %cst_19 = arith.constant 0.000000e+00 : f32
    %31 = vector.broadcast %cst_19 : f32 to vector<16x128xf32>
    %32 = arith.subf %31, %30 : vector<16x128xf32>
    %33 = math.exp %32 : vector<16x128xf32>
    %cst_20 = arith.constant 1.000000e+00 : f32
    %34 = vector.broadcast %cst_20 : f32 to vector<16x128xf32>
    %35 = arith.addf %34, %33 : vector<16x128xf32>
    %36 = tpu.reciprocal %35 {approx = true} : vector<16x128xf32> -> vector<16x128xf32>
    %37 = arith.truncf %36 : vector<16x128xf32> to vector<16x128xbf16>
    %c0_21 = arith.constant 0 : index
    %c0_22 = arith.constant 0 : index
    %38 = vector.load %arg8[%c0_21, %c0_22] : memref<16x128xbf16, #tpu.memory_space<vmem>>, vector<16x128xbf16>
    tpu.vector_store %arg8[%c0_21, %c0_22], %37 {strides = array<i32>} : memref<16x128xbf16, #tpu.memory_space<vmem>>, vector<16x128xbf16>,
    return
  }
  func.func @transform_0(%arg0: i32) -> (i32, i32) {
    %c0_i32 = arith.constant 0 : i32
    %c0_i32_0 = arith.constant 0 : i32
    return %arg0, %c0_i32 : i32, i32
  }
  func.func @transform_1(%arg0: i32) -> (i32, i32) {
    %c0_i32 = arith.constant 0 : i32
    %c0_i32_0 = arith.constant 0 : i32
    %c0_i32_1 = arith.constant 0 : i32
    return %c0_i32, %c0_i32_0 : i32, i32
  }
  func.func @transform_2(%arg0: i32) -> (i32, i32) {
    %c0_i32 = arith.constant 0 : i32
    %c0_i32_0 = arith.constant 0 : i32
    %c0_i32_1 = arith.constant 0 : i32
    return %c0_i32, %c0_i32_0 : i32, i32
  }
  func.func @transform_3(%arg0: i32) -> (i32, i32) {
    %c0_i32 = arith.constant 0 : i32
    %c0_i32_0 = arith.constant 0 : i32
    %c0_i32_1 = arith.constant 0 : i32
    return %c0_i32, %c0_i32_0 : i32, i32
  }
  func.func @transform_4(%arg0: i32) -> (i32, i32) {
    %c0_i32 = arith.constant 0 : i32
    %c0_i32_0 = arith.constant 0 : i32
    %c0_i32_1 = arith.constant 0 : i32
    return %c0_i32, %c0_i32_0 : i32, i32
  }
  func.func @transform_5(%arg0: i32) -> (i32, i32) {
    %c0_i32 = arith.constant 0 : i32
    %c0_i32_0 = arith.constant 0 : i32
    %c0_i32_1 = arith.constant 0 : i32
    return %c0_i32, %c0_i32_0 : i32, i32
  }
  func.func @transform_6(%arg0: i32) -> (i32, i32) {
    %c0_i32 = arith.constant 0 : i32
    %c0_i32_0 = arith.constant 0 : i32
    %c0_i32_1 = arith.constant 0 : i32
    return %c0_i32, %c0_i32_0 : i32, i32
  }
  func.func @transform_7(%arg0: i32) -> (i32, i32) {
    %c0_i32 = arith.constant 0 : i32
    %c0_i32_0 = arith.constant 0 : i32
    return %arg0, %c0_i32 : i32, i32
  }
}

module attributes {stable_mosaic.version = 11 : i64} {
  func.func @_discriminator_kernel(%arg0: i32, %arg1: memref<16x128xf32, #tpu.memory_space<vmem>>, %arg2: memref<128x128xbf16, #tpu.memory_space<vmem>>, %arg3: memref<1x128xf32, #tpu.memory_space<vmem>>, %arg4: memref<128x128xbf16, #tpu.memory_space<vmem>>, %arg5: memref<1x128xf32, #tpu.memory_space<vmem>>, %arg6: memref<128x128xbf16, #tpu.memory_space<vmem>>, %arg7: memref<1x128xf32, #tpu.memory_space<vmem>>, %arg8: memref<16x128xbf16, #tpu.memory_space<vmem>>) attributes {dimension_semantics = [#tpu.dimension_semantics<parallel>], iteration_bounds = array<i64: 1>, scalar_prefetch = 0 : i64, scratch_operands = 0 : i64, tpu.core_type = #tpu.core_type<tc>, window_params = [{transform_indices = @transform_0, window_bounds = array<i64: 16, 128>}, {pipeline_mode = #tpu.pipeline_mode<synchronous>, transform_indices = @transform_1, window_bounds = array<i64: 128, 128>}, {pipeline_mode = #tpu.pipeline_mode<synchronous>, transform_indices = @transform_2, window_bounds = array<i64: 1, 128>}, {pipeline_mode = #tpu.pipeline_mode<synchronous>, transform_indices = @transform_3, window_bounds = array<i64: 128, 128>}, {pipeline_mode = #tpu.pipeline_mode<synchronous>, transform_indices = @transform_4, window_bounds = array<i64: 1, 128>}, {pipeline_mode = #tpu.pipeline_mode<synchronous>, transform_indices = @transform_5, window_bounds = array<i64: 128, 128>}, {pipeline_mode = #tpu.pipeline_mode<synchronous>, transform_indices = @transform_6, window_bounds = array<i64: 1, 128>}, {transform_indices = @transform_7, window_bounds = array<i64: 16, 128>}]} {
    %c0 = arith.constant 0 : index
    %c0_0 = arith.constant 0 : index
    %0 = vector.load %arg1[%c0, %c0_0] : memref<16x128xf32, #tpu.memory_space<vmem>>, vector<16x128xf32>
    %1 = arith.truncf %0 : vector<16x128xf32> to vector<16x128xbf16>
    %c0_1 = arith.constant 0 : index
    %c0_2 = arith.constant 0 : index
    %2 = vector.load %arg2[%c0_1, %c0_2] : memref<128x128xbf16, #tpu.memory_space<vmem>>, vector<128x128xbf16>
    %cst = arith.constant dense<0.000000e+00> : vector<16x128xf32>
    %3 = tpu.matmul %1, %2, %cst {dimension_numbers = #tpu.dot_dimension_numbers<[1], [0], [0], [1], [0, 0, 1, 1], [], []>} : vector<16x128xbf16>, vector<128x128xbf16>, vector<16x128xf32> -> vector<16x128xf32>
    %c0_3 = arith.constant 0 : index
    %c0_4 = arith.constant 0 : index
    %4 = vector.load %arg3[%c0_3, %c0_4] : memref<1x128xf32, #tpu.memory_space<vmem>>, vector<1x128xf32>
    %5 = vector.broadcast %4 : vector<1x128xf32> to vector<16x128xf32>
    %6 = arith.addf %3, %5 : vector<16x128xf32>
    %cst_5 = arith.constant 0.000000e+00 : f32
    %7 = vector.broadcast %cst_5 : f32 to vector<16x128xf32>
    %8 = arith.subf %7, %6 : vector<16x128xf32>
    %9 = math.exp %8 : vector<16x128xf32>
    %cst_6 = arith.constant 1.000000e+00 : f32
    %10 = vector.broadcast %cst_6 : f32 to vector<16x128xf32>
    %11 = arith.addf %10, %9 : vector<16x128xf32>
    %12 = tpu.reciprocal %11 {approx = true} : vector<16x128xf32> -> vector<16x128xf32>
    %13 = arith.truncf %12 : vector<16x128xf32> to vector<16x128xbf16>
    %c0_7 = arith.constant 0 : index
    %c0_8 = arith.constant 0 : index
    %14 = vector.load %arg4[%c0_7, %c0_8] : memref<128x128xbf16, #tpu.memory_space<vmem>>, vector<128x128xbf16>
    %cst_9 = arith.constant dense<0.000000e+00> : vector<16x128xf32>
    %15 = tpu.matmul %13, %14, %cst_9 {dimension_numbers = #tpu.dot_dimension_numbers<[1], [0], [0], [1], [0, 0, 1, 1], [], []>} : vector<16x128xbf16>, vector<128x128xbf16>, vector<16x128xf32> -> vector<16x128xf32>
    %c0_10 = arith.constant 0 : index
    %c0_11 = arith.constant 0 : index
    %16 = vector.load %arg5[%c0_10, %c0_11] : memref<1x128xf32, #tpu.memory_space<vmem>>, vector<1x128xf32>
    %17 = vector.broadcast %16 : vector<1x128xf32> to vector<16x128xf32>
    %18 = arith.addf %15, %17 : vector<16x128xf32>
    %cst_12 = arith.constant 0.000000e+00 : f32
    %19 = vector.broadcast %cst_12 : f32 to vector<16x128xf32>
    %20 = arith.subf %19, %18 : vector<16x128xf32>
    %21 = math.exp %20 : vector<16x128xf32>
    %cst_13 = arith.constant 1.000000e+00 : f32
    %22 = vector.broadcast %cst_13 : f32 to vector<16x128xf32>
    %23 = arith.addf %22, %21 : vector<16x128xf32>
    %24 = tpu.reciprocal %23 {approx = true} : vector<16x128xf32> -> vector<16x128xf32>
    %25 = arith.truncf %24 : vector<16x128xf32> to vector<16x128xbf16>
    %c0_14 = arith.constant 0 : index
    %c0_15 = arith.constant 0 : index
    %26 = vector.load %arg6[%c0_14, %c0_15] : memref<128x128xbf16, #tpu.memory_space<vmem>>, vector<128x128xbf16>
    %cst_16 = arith.constant dense<0.000000e+00> : vector<16x128xf32>
    %27 = tpu.matmul %25, %26, %cst_16 {dimension_numbers = #tpu.dot_dimension_numbers<[1], [0], [0], [1], [0, 0, 1, 1], [], []>} : vector<16x128xbf16>, vector<128x128xbf16>, vector<16x128xf32> -> vector<16x128xf32>
    %c0_17 = arith.constant 0 : index
    %c0_18 = arith.constant 0 : index
    %28 = vector.load %arg7[%c0_17, %c0_18] : memref<1x128xf32, #tpu.memory_space<vmem>>, vector<1x128xf32>
    %29 = vector.broadcast %28 : vector<1x128xf32> to vector<16x128xf32>
    %30 = arith.addf %27, %29 : vector<16x128xf32>
    %cst_19 = arith.constant 0.000000e+00 : f32
    %31 = vector.broadcast %cst_19 : f32 to vector<16x128xf32>
    %32 = arith.subf %31, %30 : vector<16x128xf32>
    %33 = math.exp %32 : vector<16x128xf32>
    %cst_20 = arith.constant 1.000000e+00 : f32
    %34 = vector.broadcast %cst_20 : f32 to vector<16x128xf32>
    %35 = arith.addf %34, %33 : vector<16x128xf32>
    %36 = tpu.reciprocal %35 {approx = true} : vector<16x128xf32> -> vector<16x128xf32>
    %37 = arith.truncf %36 : vector<16x128xf32> to vector<16x128xbf16>
    %c0_21 = arith.constant 0 : index
    %c0_22 = arith.constant 0 : index
    %38 = vector.load %arg8[%c0_21, %c0_22] : memref<16x128xbf16, #tpu.memory_space<vmem>>, vector<16x128xbf16>
    tpu.vector_store %arg8[%c0_21, %c0_22], %37 {strides = array<i32>} : memref<16x128xbf16, #tpu.memory_space<vmem>>, vector<16x128xbf16>,
    return
  }
  func.func @transform_0(%arg0: i32) -> (i32, i32) {
    %c0_i32 = arith.constant 0 : i32
    %c0_i32_0 = arith.constant 0 : i32
    return %arg0, %c0_i32 : i32, i32
  }
  func.func @transform_1(%arg0: i32) -> (i32, i32) {
    %c0_i32 = arith.constant 0 : i32
    %c0_i32_0 = arith.constant 0 : i32
    %c0_i32_1 = arith.constant 0 : i32
    return %c0_i32, %c0_i32_0 : i32, i32
  }
  func.func @transform_2(%arg0: i32) -> (i32, i32) {
    %c0_i32 = arith.constant 0 : i32
    %c0_i32_0 = arith.constant 0 : i32
    %c0_i32_1 = arith.constant 0 : i32
    return %c0_i32, %c0_i32_0 : i32, i32
  }
  func.func @transform_3(%arg0: i32) -> (i32, i32) {
    %c0_i32 = arith.constant 0 : i32
    %c0_i32_0 = arith.constant 0 : i32
    %c0_i32_1 = arith.constant 0 : i32
    return %c0_i32, %c0_i32_0 : i32, i32
  }
  func.func @transform_4(%arg0: i32) -> (i32, i32) {
    %c0_i32 = arith.constant 0 : i32
    %c0_i32_0 = arith.constant 0 : i32
    %c0_i32_1 = arith.constant 0 : i32
    return %c0_i32, %c0_i32_0 : i32, i32
  }
  func.func @transform_5(%arg0: i32) -> (i32, i32) {
    %c0_i32 = arith.constant 0 : i32
    %c0_i32_0 = arith.constant 0 : i32
    %c0_i32_1 = arith.constant 0 : i32
    return %c0_i32, %c0_i32_0 : i32, i32
  }
  func.func @transform_6(%arg0: i32) -> (i32, i32) {
    %c0_i32 = arith.constant 0 : i32
    %c0_i32_0 = arith.constant 0 : i32
    %c0_i32_1 = arith.constant 0 : i32
    return %c0_i32, %c0_i32_0 : i32, i32
  }
  func.func @transform_7(%arg0: i32) -> (i32, i32) {
    %c0_i32 = arith.constant 0 : i32
    %c0_i32_0 = arith.constant 0 : i32
    return %arg0, %c0_i32 : i32, i32
  }
}

</mosaic_0001>

<llo_original>
// kernel: tpu_custom_call.1
$region0: #{tpu_custom_call.1}
  #allocation0 [shape = 'u32[]', space=smem, size = 0x4, offset = 0x4, fixed_abs, tag = 'smem constant byte address 0x4 - core index']
  #allocation1 [shape = 'u32[144,128]{1,0:T(1,128)}', space=vmem, size = 0x12000, scoped, tag = 'internal scratch']
  %s0 = inlined_call_operand.hbm [shape: f32[16,128], index: 0, kind: input, shape index: {}]
  %s1 = inlined_call_operand.hbm [shape: bf16[128,128], index: 1, kind: input, shape index: {}]
  %s2 = inlined_call_operand.vmem [shape: f32[1,128], index: 2, kind: input, shape index: {}]
  %s3 = inlined_call_operand.hbm [shape: bf16[128,128], index: 3, kind: input, shape index: {}]
  %s4 = inlined_call_operand.vmem [shape: f32[1,128], index: 4, kind: input, shape index: {}]
  %s5 = inlined_call_operand.hbm [shape: bf16[128,128], index: 5, kind: input, shape index: {}]
  %s6 = inlined_call_operand.vmem [shape: f32[1,128], index: 6, kind: input, shape index: {}]
  %s7 = inlined_call_operand.hbm [shape: bf16[16,128], index: 7, kind: output, shape index: {}]
  %s8 = sld [smem:[#allocation0]]
  $region54: #{tpu_custom_call.1} parent=0
    _
  %s10 = ssub.s32 1, %s8
  %s11 = scalar_select 0, %s10, %s8
  $region1: #{tpu_custom_call.1} parent=0
    #allocation2 [shape = 'u8[8192]{0}', space=vmem, size = 0x2000, scoped, tag = 'input window, operand 0, single buffered']
    #allocation3 [shape = 's32[1]{0}', space=sflag, size = 0x4, scoped, tag = 'scoped memory for tpu_custom_call.1']
    #allocation4 [shape = 's32[1]{0}', space=sflag, size = 0x4, scoped, tag = 'scoped memory for tpu_custom_call.1']
    #allocation5 [shape = 'u8[32768]{0}', space=vmem, size = 0x8000, scoped, tag = 'input window, operand 1, single buffered']
    #allocation6 [shape = 's32[1]{0}', space=sflag, size = 0x4, scoped, tag = 'scoped memory for tpu_custom_call.1']
    #allocation7 [shape = 'u8[32768]{0}', space=vmem, size = 0x8000, scoped, tag = 'input window, operand 3, single buffered']
    #allocation8 [shape = 'u8[32768]{0}', space=vmem, size = 0x8000, scoped, tag = 'input window, operand 5, single buffered']
    #allocation9 [shape = 's32[1]{0}', space=sflag, size = 0x4, scoped, tag = 'scoped memory for tpu_custom_call.1']
    #allocation10 [shape = 'u8[4096]{0}', space=vmem, size = 0x1000, scoped, tag = 'output window, operand 0, single buffered']
    %12 = vsyncpa [#allocation3], 0
    %13 = vsyncpa [#allocation6], 0
    %14 = vsyncpa [#allocation9], 0
    %15 = vsyncpa [#allocation4], 0
    // Predicated region
    $region2: #{tpu_custom_call.1} parent=1 // pred_check
      _
    $region3: #{tpu_custom_call.1} parent=1 // pred_check_branch
      %17 = sbr.rel (0) target = $region5
    $region4: #{tpu_custom_call.1} parent=1 // pred_region
      %s19 = ssub.s32 256, 256
      %20 = vsyncadd [#allocation3], %s19
      %s21 = sshll.u32 [#allocation2], 4
      %s22 = int_to_ptr.vmem [resolvable:$true] %s21
      %27 = dma.hbm_to_vmem [thread:$0]  %s0, 256, %s22, [#allocation3], 128, 128, 8
    $region5: #{tpu_custom_call.1} parent=1 // pred_fallthru
      _
    // Predicated region
    $region6: #{tpu_custom_call.1} parent=1 // pred_check
      _
    $region7: #{tpu_custom_call.1} parent=1 // pred_check_branch
      %29 = sbr.rel (0) target = $region9
    $region8: #{tpu_custom_call.1} parent=1 // pred_region
      %s31 = ssub.s32 1024, 1024
      %32 = vsyncadd [#allocation6], %s31
      %s33 = sshll.u32 [#allocation5], 4
      %s34 = int_to_ptr.vmem [resolvable:$true] %s33
      %39 = dma.hbm_to_vmem [thread:$0]  %s1, 1024, %s34, [#allocation6], 64, 64, 4
    $region9: #{tpu_custom_call.1} parent=1 // pred_fallthru
      _
    // Predicated region
    $region10: #{tpu_custom_call.1} parent=1 // pred_check
      _
    $region11: #{tpu_custom_call.1} parent=1 // pred_check_branch
      %41 = sbr.rel (0) target = $region13
    $region12: #{tpu_custom_call.1} parent=1 // pred_region
      _
    $region13: #{tpu_custom_call.1} parent=1 // pred_fallthru
      _
    // Predicated region
    $region14: #{tpu_custom_call.1} parent=1 // pred_check
      _
    $region15: #{tpu_custom_call.1} parent=1 // pred_check_branch
      %43 = sbr.rel (0) target = $region17
    $region16: #{tpu_custom_call.1} parent=1 // pred_region
      %s45 = ssub.s32 1024, 1024
      %46 = vsyncadd [#allocation6], %s45
      %s47 = sshll.u32 [#allocation7], 4
      %s48 = int_to_ptr.vmem [resolvable:$true] %s47
      %53 = dma.hbm_to_vmem [thread:$0]  %s3, 1024, %s48, [#allocation6], 64, 64, 4
    $region17: #{tpu_custom_call.1} parent=1 // pred_fallthru
      _
    // Predicated region
    $region18: #{tpu_custom_call.1} parent=1 // pred_check
      _
    $region19: #{tpu_custom_call.1} parent=1 // pred_check_branch
      %55 = sbr.rel (0) target = $region21
    $region20: #{tpu_custom_call.1} parent=1 // pred_region
      _
    $region21: #{tpu_custom_call.1} parent=1 // pred_fallthru
      _
    // Predicated region
    $region22: #{tpu_custom_call.1} parent=1 // pred_check
      _
    $region23: #{tpu_custom_call.1} parent=1 // pred_check_branch
      %57 = sbr.rel (0) target = $region25
    $region24: #{tpu_custom_call.1} parent=1 // pred_region
      %s59 = ssub.s32 1024, 1024
      %60 = vsyncadd [#allocation9], %s59
      %s61 = sshll.u32 [#allocation8], 4
      %s62 = int_to_ptr.vmem [resolvable:$true] %s61
      %67 = dma.hbm_to_vmem [thread:$0]  %s5, 1024, %s62, [#allocation9], 64, 64, 4
    $region25: #{tpu_custom_call.1} parent=1 // pred_fallthru
      _
    // Predicated region
    $region26: #{tpu_custom_call.1} parent=1 // pred_check
      _
    $region27: #{tpu_custom_call.1} parent=1 // pred_check_branch
      %69 = sbr.rel (0) target = $region29
    $region28: #{tpu_custom_call.1} parent=1 // pred_region
      _
    $region29: #{tpu_custom_call.1} parent=1 // pred_fallthru
      _
    // Predicated region
    $region30: #{tpu_custom_call.1} parent=1 // pred_check
      _
    $region31: #{tpu_custom_call.1} parent=1 // pred_check_branch
      %71 = sbr.rel (0) target = $region33
    $region32: #{tpu_custom_call.1} parent=1 // pred_region
      %72 = dma.done [#allocation3], 256
    $region33: #{tpu_custom_call.1} parent=1 // pred_fallthru
      _
    // Predicated region
    $region34: #{tpu_custom_call.1} parent=1 // pred_check
      _
    $region35: #{tpu_custom_call.1} parent=1 // pred_check_branch
      %74 = sbr.rel (0) target = $region37
    $region36: #{tpu_custom_call.1} parent=1 // pred_region
      %75 = dma.done [#allocation6], 1024
    $region37: #{tpu_custom_call.1} parent=1 // pred_fallthru
      _
    // Predicated region
    $region38: #{tpu_custom_call.1} parent=1 // pred_check
      _
    $region39: #{tpu_custom_call.1} parent=1 // pred_check_branch
      %77 = sbr.rel (0) target = $region41
    $region40: #{tpu_custom_call.1} parent=1 // pred_region
      %78 = dma.done [#allocation6], 1024
    $region41: #{tpu_custom_call.1} parent=1 // pred_fallthru
      _
    // Predicated region
    $region42: #{tpu_custom_call.1} parent=1 // pred_check
      _
    $region43: #{tpu_custom_call.1} parent=1 // pred_check_branch
      %80 = sbr.rel (0) target = $region45
    $region44: #{tpu_custom_call.1} parent=1 // pred_region
      %81 = dma.done [#allocation9], 1024
    $region45: #{tpu_custom_call.1} parent=1 // pred_fallthru
      _
    %v83 = vld [vmem:[#allocation2] sm:$0xff]
    %v84 = vld [vmem:[#allocation2 + $0x8] sm:$0xff]
    %v85 = vpack.c.bf16 %v84, %v83
    %v86 = vld [vmem:[#allocation5] sm:$0xf]
    %v87 = vld [vmem:[#allocation5 + $0x4] sm:$0xf]
    %v88 = vld [vmem:[#allocation5 + $0x8] sm:$0xf]
    %v89 = vld [vmem:[#allocation5 + $0xc] sm:$0xf]
    %v90 = vld [vmem:[#allocation5 + $0x10] sm:$0xf]
    %v91 = vld [vmem:[#allocation5 + $0x14] sm:$0xf]
    %v92 = vld [vmem:[#allocation5 + $0x18] sm:$0xf]
    %v93 = vld [vmem:[#allocation5 + $0x1c] sm:$0xf]
    %v94 = vld [vmem:[#allocation5 + $0x20] sm:$0xf]
    %v95 = vld [vmem:[#allocation5 + $0x24] sm:$0xf]
    %v96 = vld [vmem:[#allocation5 + $0x28] sm:$0xf]
    %v97 = vld [vmem:[#allocation5 + $0x2c] sm:$0xf]
    %v98 = vld [vmem:[#allocation5 + $0x30] sm:$0xf]
    %v99 = vld [vmem:[#allocation5 + $0x34] sm:$0xf]
    %v100 = vld [vmem:[#allocation5 + $0x38] sm:$0xf]
    %v101 = vld [vmem:[#allocation5 + $0x3c] sm:$0xf]
    %v102 = vld [vmem:[%s2] sm:$0x1]
    %v104 = vlaneseq
    %v105 = vshrl.u32 %v104, 7
    %v106 = vsub.s32 0, %v105
    %v107 = vrot.slane %v102, %v106
    %v125 = vunpack.c.l.b16 %v86
    %v126 = vunpack.c.l.b16 %v87
    %v127 = vunpack.c.l.b16 %v88
    %v128 = vunpack.c.l.b16 %v89
    %v129 = vunpack.c.l.b16 %v90
    %v130 = vunpack.c.l.b16 %v91
    %v131 = vunpack.c.l.b16 %v92
    %v132 = vunpack.c.l.b16 %v93
    %v133 = vunpack.c.l.b16 %v94
    %v134 = vunpack.c.l.b16 %v95
    %v135 = vunpack.c.l.b16 %v96
    %v136 = vunpack.c.l.b16 %v97
    %v137 = vunpack.c.l.b16 %v98
    %v138 = vunpack.c.l.b16 %v99
    %v139 = vunpack.c.l.b16 %v100
    %v140 = vunpack.c.l.b16 %v101
    %v141 = vpack.c.b16 %v126, %v125
    %v142 = vpack.c.b16 %v128, %v127
    %v143 = vpack.c.b16 %v130, %v129
    %v144 = vpack.c.b16 %v132, %v131
    %v145 = vpack.c.b16 %v134, %v133
    %v146 = vpack.c.b16 %v136, %v135
    %v147 = vpack.c.b16 %v138, %v137
    %v148 = vpack.c.b16 %v140, %v139
    %157 = vmatprep.subr.bf16.mxu0 0
    %158 = vmatpush1.bf16.msra.mxu0 %v141
    %159 = vmatprep.subr.bf16.mxu0 0
    %160 = vmatpush1.bf16.msra.mxu0 %v142
    %161 = vmatprep.subr.bf16.mxu0 0
    %162 = vmatpush1.bf16.msra.mxu0 %v143
    %163 = vmatprep.subr.bf16.mxu0 0
    %164 = vmatpush1.bf16.msra.mxu0 %v144
    %165 = vmatprep.subr.bf16.mxu0 0
    %166 = vmatpush1.bf16.msra.mxu0 %v145
    %167 = vmatprep.subr.bf16.mxu0 0
    %168 = vmatpush1.bf16.msra.mxu0 %v146
    %169 = vmatprep.subr.bf16.mxu0 0
    %170 = vmatpush1.bf16.msra.mxu0 %v147
    %171 = vmatprep.subr.bf16.mxu0 0
    %172 = vmatpush1.bf16.msra.mxu0 %v148
    %173 = vmatprep.subr.bf16.mxu0 0
    %174 = vmatpush1.bf16.msra.mxu0 0
    %175 = vmatprep.subr.bf16.mxu0 0
    %176 = vmatpush1.bf16.msra.mxu0 0
    %177 = vmatprep.subr.bf16.mxu0 0
    %178 = vmatpush1.bf16.msra.mxu0 0
    %179 = vmatprep.subr.bf16.mxu0 0
    %180 = vmatpush1.bf16.msra.mxu0 0
    %181 = vmatprep.subr.bf16.mxu0 0
    %182 = vmatpush1.bf16.msra.mxu0 0
    %183 = vmatprep.subr.bf16.mxu0 0
    %184 = vmatpush1.bf16.msra.mxu0 0
    %185 = vmatprep.subr.bf16.mxu0 0
    %186 = vmatpush1.bf16.msra.mxu0 0
    %187 = vmatprep.subr.bf16.mxu0 0
    %188 = vmatpush1.bf16.msra.mxu0 0
    %189 = vmatprep.mubr.bf16.mxu0 0
    %190 = vmatmul.mubr.bf16.gmra.mrb[0].mxu0 %v85
    %v191 = vpop.f32.mrb[0].mxu0
    %v192 = vadd.f32 %v107, %v191
    %v193 = vpop.f32.mrb[0].mxu0
    %v194 = vpop.f32.mrb[0].mxu0
    %v195 = vadd.f32 %v107, %v194
    %v196 = vpop.f32.mrb[0].mxu0
    %197 = vdwg.mxu0
    %v198 = vsub.f32 0.0, %v192
    %v199 = vsub.f32 0.0, %v195
    %v200 = vmul.f32 %v198, 1.442695
    %v201 = vpow.pop %v200
    %v202 = vmul.f32 %v199, 1.442695
    %v203 = vpow.pop %v202
    %v204 = vadd.f32 %v201, 1.0
    %v205 = vadd.f32 %v203, 1.0
    %v206 = vrcp.pop %v204
    %v207 = vrcp.pop %v205
    %v208 = vpack.c.bf16 %v207, %v206
    %v209 = vld [vmem:[#allocation7] sm:$0xf]
    %v210 = vld [vmem:[#allocation7 + $0x4] sm:$0xf]
    %v211 = vld [vmem:[#allocation7 + $0x8] sm:$0xf]
    %v212 = vld [vmem:[#allocation7 + $0xc] sm:$0xf]
    %v213 = vld [vmem:[#allocation7 + $0x10] sm:$0xf]
    %v214 = vld [vmem:[#allocation7 + $0x14] sm:$0xf]
    %v215 = vld [vmem:[#allocation7 + $0x18] sm:$0xf]
    %v216 = vld [vmem:[#allocation7 + $0x1c] sm:$0xf]
    %v217 = vld [vmem:[#allocation7 + $0x20] sm:$0xf]
    %v218 = vld [vmem:[#allocation7 + $0x24] sm:$0xf]
    %v219 = vld [vmem:[#allocation7 + $0x28] sm:$0xf]
    %v220 = vld [vmem:[#allocation7 + $0x2c] sm:$0xf]
    %v221 = vld [vmem:[#allocation7 + $0x30] sm:$0xf]
    %v222 = vld [vmem:[#allocation7 + $0x34] sm:$0xf]
    %v223 = vld [vmem:[#allocation7 + $0x38] sm:$0xf]
    %v224 = vld [vmem:[#allocation7 + $0x3c] sm:$0xf]
    %v225 = vld [vmem:[%s4] sm:$0x1]
    %v227 = vlaneseq
    %v228 = vshrl.u32 %v227, 7
    %v229 = vsub.s32 0, %v228
    %v230 = vrot.slane %v225, %v229
    %v248 = vunpack.c.l.b16 %v209
    %v249 = vunpack.c.l.b16 %v210
    %v250 = vunpack.c.l.b16 %v211
    %v251 = vunpack.c.l.b16 %v212
    %v252 = vunpack.c.l.b16 %v213
    %v253 = vunpack.c.l.b16 %v214
    %v254 = vunpack.c.l.b16 %v215
    %v255 = vunpack.c.l.b16 %v216
    %v256 = vunpack.c.l.b16 %v217
    %v257 = vunpack.c.l.b16 %v218
    %v258 = vunpack.c.l.b16 %v219
    %v259 = vunpack.c.l.b16 %v220
    %v260 = vunpack.c.l.b16 %v221
    %v261 = vunpack.c.l.b16 %v222
    %v262 = vunpack.c.l.b16 %v223
    %v263 = vunpack.c.l.b16 %v224
    %v264 = vpack.c.b16 %v249, %v248
    %v265 = vpack.c.b16 %v251, %v250
    %v266 = vpack.c.b16 %v253, %v252
    %v267 = vpack.c.b16 %v255, %v254
    %v268 = vpack.c.b16 %v257, %v256
    %v269 = vpack.c.b16 %v259, %v258
    %v270 = vpack.c.b16 %v261, %v260
    %v271 = vpack.c.b16 %v263, %v262
    %280 = vmatprep.subr.bf16.mxu0 0
    %281 = vmatpush1.bf16.msra.mxu0 %v264
    %282 = vmatprep.subr.bf16.mxu0 0
    %283 = vmatpush1.bf16.msra.mxu0 %v265
    %284 = vmatprep.subr.bf16.mxu0 0
    %285 = vmatpush1.bf16.msra.mxu0 %v266
    %286 = vmatprep.subr.bf16.mxu0 0
    %287 = vmatpush1.bf16.msra.mxu0 %v267
    %288 = vmatprep.subr.bf16.mxu0 0
    %289 = vmatpush1.bf16.msra.mxu0 %v268
    %290 = vmatprep.subr.bf16.mxu0 0
    %291 = vmatpush1.bf16.msra.mxu0 %v269
    %292 = vmatprep.subr.bf16.mxu0 0
    %293 = vmatpush1.bf16.msra.mxu0 %v270
    %294 = vmatprep.subr.bf16.mxu0 0
    %295 = vmatpush1.bf16.msra.mxu0 %v271
    %296 = vmatprep.subr.bf16.mxu0 0
    %297 = vmatpush1.bf16.msra.mxu0 0
    %298 = vmatprep.subr.bf16.mxu0 0
    %299 = vmatpush1.bf16.msra.mxu0 0
    %300 = vmatprep.subr.bf16.mxu0 0
    %301 = vmatpush1.bf16.msra.mxu0 0
    %302 = vmatprep.subr.bf16.mxu0 0
    %303 = vmatpush1.bf16.msra.mxu0 0
    %304 = vmatprep.subr.bf16.mxu0 0
    %305 = vmatpush1.bf16.msra.mxu0 0
    %306 = vmatprep.subr.bf16.mxu0 0
    %307 = vmatpush1.bf16.msra.mxu0 0
    %308 = vmatprep.subr.bf16.mxu0 0
    %309 = vmatpush1.bf16.msra.mxu0 0
    %310 = vmatprep.subr.bf16.mxu0 0
    %311 = vmatpush1.bf16.msra.mxu0 0
    %312 = vmatprep.mubr.bf16.mxu0 0
    %313 = vmatmul.mubr.bf16.gmra.mrb[0].mxu0 %v208
    %v314 = vpop.f32.mrb[0].mxu0
    %v315 = vadd.f32 %v230, %v314
    %v316 = vpop.f32.mrb[0].mxu0
    %v317 = vpop.f32.mrb[0].mxu0
    %v318 = vadd.f32 %v230, %v317
    %v319 = vpop.f32.mrb[0].mxu0
    %320 = vdwg.mxu0
    %v321 = vsub.f32 0.0, %v315
    %v322 = vsub.f32 0.0, %v318
    %v323 = vmul.f32 %v321, 1.442695
    %v324 = vpow.pop %v323
    %v325 = vmul.f32 %v322, 1.442695
    %v326 = vpow.pop %v325
    %v327 = vadd.f32 %v324, 1.0
    %v328 = vadd.f32 %v326, 1.0
    %v329 = vrcp.pop %v327
    %v330 = vrcp.pop %v328
    %v331 = vpack.c.bf16 %v330, %v329
    %v332 = vld [vmem:[#allocation8] sm:$0xf]
    %v333 = vld [vmem:[#allocation8 + $0x4] sm:$0xf]
    %v334 = vld [vmem:[#allocation8 + $0x8] sm:$0xf]
    %v335 = vld [vmem:[#allocation8 + $0xc] sm:$0xf]
    %v336 = vld [vmem:[#allocation8 + $0x10] sm:$0xf]
    %v337 = vld [vmem:[#allocation8 + $0x14] sm:$0xf]
    %v338 = vld [vmem:[#allocation8 + $0x18] sm:$0xf]
    %v339 = vld [vmem:[#allocation8 + $0x1c] sm:$0xf]
    %v340 = vld [vmem:[#allocation8 + $0x20] sm:$0xf]
    %v341 = vld [vmem:[#allocation8 + $0x24] sm:$0xf]
    %v342 = vld [vmem:[#allocation8 + $0x28] sm:$0xf]
    %v343 = vld [vmem:[#allocation8 + $0x2c] sm:$0xf]
    %v344 = vld [vmem:[#allocation8 + $0x30] sm:$0xf]
    %v345 = vld [vmem:[#allocation8 + $0x34] sm:$0xf]
    %v346 = vld [vmem:[#allocation8 + $0x38] sm:$0xf]
    %v347 = vld [vmem:[#allocation8 + $0x3c] sm:$0xf]
    %v348 = vld [vmem:[%s6] sm:$0x1]
    %v350 = vlaneseq
    %v351 = vshrl.u32 %v350, 7
    %v352 = vsub.s32 0, %v351
    %v353 = vrot.slane %v348, %v352
    %v371 = vunpack.c.l.b16 %v332
    %v372 = vunpack.c.l.b16 %v333
    %v373 = vunpack.c.l.b16 %v334
    %v374 = vunpack.c.l.b16 %v335
    %v375 = vunpack.c.l.b16 %v336
    %v376 = vunpack.c.l.b16 %v337
    %v377 = vunpack.c.l.b16 %v338
    %v378 = vunpack.c.l.b16 %v339
    %v379 = vunpack.c.l.b16 %v340
    %v380 = vunpack.c.l.b16 %v341
    %v381 = vunpack.c.l.b16 %v342
    %v382 = vunpack.c.l.b16 %v343
    %v383 = vunpack.c.l.b16 %v344
    %v384 = vunpack.c.l.b16 %v345
    %v385 = vunpack.c.l.b16 %v346
    %v386 = vunpack.c.l.b16 %v347
    %v387 = vpack.c.b16 %v372, %v371
    %v388 = vpack.c.b16 %v374, %v373
    %v389 = vpack.c.b16 %v376, %v375
    %v390 = vpack.c.b16 %v378, %v377
    %v391 = vpack.c.b16 %v380, %v379
    %v392 = vpack.c.b16 %v382, %v381
    %v393 = vpack.c.b16 %v384, %v383
    %v394 = vpack.c.b16 %v386, %v385
    %403 = vmatprep.subr.bf16.mxu0 0
    %404 = vmatpush1.bf16.msra.mxu0 %v387
    %405 = vmatprep.subr.bf16.mxu0 0
    %406 = vmatpush1.bf16.msra.mxu0 %v388
    %407 = vmatprep.subr.bf16.mxu0 0
    %408 = vmatpush1.bf16.msra.mxu0 %v389
    %409 = vmatprep.subr.bf16.mxu0 0
    %410 = vmatpush1.bf16.msra.mxu0 %v390
    %411 = vmatprep.subr.bf16.mxu0 0
    %412 = vmatpush1.bf16.msra.mxu0 %v391
    %413 = vmatprep.subr.bf16.mxu0 0
    %414 = vmatpush1.bf16.msra.mxu0 %v392
    %415 = vmatprep.subr.bf16.mxu0 0
    %416 = vmatpush1.bf16.msra.mxu0 %v393
    %417 = vmatprep.subr.bf16.mxu0 0
    %418 = vmatpush1.bf16.msra.mxu0 %v394
    %419 = vmatprep.subr.bf16.mxu0 0
    %420 = vmatpush1.bf16.msra.mxu0 0
    %421 = vmatprep.subr.bf16.mxu0 0
    %422 = vmatpush1.bf16.msra.mxu0 0
    %423 = vmatprep.subr.bf16.mxu0 0
    %424 = vmatpush1.bf16.msra.mxu0 0
    %425 = vmatprep.subr.bf16.mxu0 0
    %426 = vmatpush1.bf16.msra.mxu0 0
    %427 = vmatprep.subr.bf16.mxu0 0
    %428 = vmatpush1.bf16.msra.mxu0 0
    %429 = vmatprep.subr.bf16.mxu0 0
    %430 = vmatpush1.bf16.msra.mxu0 0
    %431 = vmatprep.subr.bf16.mxu0 0
    %432 = vmatpush1.bf16.msra.mxu0 0
    %433 = vmatprep.subr.bf16.mxu0 0
    %434 = vmatpush1.bf16.msra.mxu0 0
    %435 = vmatprep.mubr.bf16.mxu0 0
    %436 = vmatmul.mubr.bf16.gmra.mrb[0].mxu0 %v331
    %v437 = vpop.f32.mrb[0].mxu0
    %v438 = vadd.f32 %v353, %v437
    %v439 = vpop.f32.mrb[0].mxu0
    %v440 = vpop.f32.mrb[0].mxu0
    %v441 = vadd.f32 %v353, %v440
    %v442 = vpop.f32.mrb[0].mxu0
    %443 = vdwg.mxu0
    %v444 = vsub.f32 0.0, %v438
    %v445 = vsub.f32 0.0, %v441
    %v446 = vmul.f32 %v444, 1.442695
    %v447 = vpow.pop %v446
    %v448 = vmul.f32 %v445, 1.442695
    %v449 = vpow.pop %v448
    %v450 = vadd.f32 %v447, 1.0
    %v451 = vadd.f32 %v449, 1.0
    %v452 = vrcp.pop %v450
    %v453 = vrcp.pop %v451
    %v454 = vpack.c.bf16 %v453, %v452
    %v456 = vunpack.c.l.b16 %v454
    %v457 = vunpack.c.h.b16 %v454
    %v458 = vpack.c.b16 %v456, %v456
    %v459 = vpack.c.b16 %v457, %v457
    %462 = vst [vmem:[#allocation10] sm:$0xf] %v458
    %463 = vst [vmem:[#allocation10 + $0x4] sm:$0xf] %v459
    // Predicated region
    $region46: #{tpu_custom_call.1} parent=1 // pred_check
      _
    $region47: #{tpu_custom_call.1} parent=1 // pred_check_branch
      %465 = sbr.rel (0) target = $region49
    $region48: #{tpu_custom_call.1} parent=1 // pred_region
      %s467 = ssub.s32 128, 128
      %468 = vsyncadd [#allocation4], %s467
      %s469 = sshll.u32 [#allocation10], 4
      %s470 = int_to_ptr.vmem [resolvable:$true] %s469
      %475 = dma.vmem_to_hbm [thread:$0]  %s470, 128, %s7, [#allocation4], 64, 64, 4
    $region49: #{tpu_custom_call.1} parent=1 // pred_fallthru
      _
    // Predicated region
    $region50: #{tpu_custom_call.1} parent=1 // pred_check
      _
    $region51: #{tpu_custom_call.1} parent=1 // pred_check_branch
      %477 = sbr.rel (0) target = $region53
    $region52: #{tpu_custom_call.1} parent=1 // pred_region
      %478 = dma.done [#allocation4], 128
    $region53: #{tpu_custom_call.1} parent=1 // pred_fallthru
      _
    %479 = vsyncpa [#allocation3], 1
    %480 = vsyncpa [#allocation6], 1
    %481 = vsyncpa [#allocation9], 1
    %482 = vsyncpa [#allocation4], 1

// kernel: tpu_custom_call.1
$region0: #{tpu_custom_call.1}
  #allocation0 [shape = 'u32[]', space=smem, size = 0x4, offset = 0x4, fixed_abs, tag = 'smem constant byte address 0x4 - core index']
  #allocation1 [shape = 'u32[144,128]{1,0:T(1,128)}', space=vmem, size = 0x12000, scoped, tag = 'internal scratch']
  %s0 = inlined_call_operand.hbm [shape: f32[16,128], index: 0, kind: input, shape index: {}]
  %s1 = inlined_call_operand.hbm [shape: bf16[128,128], index: 1, kind: input, shape index: {}]
  %s2 = inlined_call_operand.vmem [shape: f32[1,128], index: 2, kind: input, shape index: {}]
  %s3 = inlined_call_operand.hbm [shape: bf16[128,128], index: 3, kind: input, shape index: {}]
  %s4 = inlined_call_operand.vmem [shape: f32[1,128], index: 4, kind: input, shape index: {}]
  %s5 = inlined_call_operand.hbm [shape: bf16[128,128], index: 5, kind: input, shape index: {}]
  %s6 = inlined_call_operand.vmem [shape: f32[1,128], index: 6, kind: input, shape index: {}]
  %s7 = inlined_call_operand.hbm [shape: bf16[16,128], index: 7, kind: output, shape index: {}]
  %s8 = sld [smem:[#allocation0]]
  $region54: #{tpu_custom_call.1} parent=0
    _
  %s10 = ssub.s32 1, %s8
  %s11 = scalar_select 0, %s10, %s8
  $region1: #{tpu_custom_call.1} parent=0
    #allocation2 [shape = 'u8[8192]{0}', space=vmem, size = 0x2000, scoped, tag = 'input window, operand 0, single buffered']
    #allocation3 [shape = 's32[1]{0}', space=sflag, size = 0x4, scoped, tag = 'scoped memory for tpu_custom_call.1']
    #allocation4 [shape = 's32[1]{0}', space=sflag, size = 0x4, scoped, tag = 'scoped memory for tpu_custom_call.1']
    #allocation5 [shape = 'u8[32768]{0}', space=vmem, size = 0x8000, scoped, tag = 'input window, operand 1, single buffered']
    #allocation6 [shape = 's32[1]{0}', space=sflag, size = 0x4, scoped, tag = 'scoped memory for tpu_custom_call.1']
    #allocation7 [shape = 'u8[32768]{0}', space=vmem, size = 0x8000, scoped, tag = 'input window, operand 3, single buffered']
    #allocation8 [shape = 'u8[32768]{0}', space=vmem, size = 0x8000, scoped, tag = 'input window, operand 5, single buffered']
    #allocation9 [shape = 's32[1]{0}', space=sflag, size = 0x4, scoped, tag = 'scoped memory for tpu_custom_call.1']
    #allocation10 [shape = 'u8[4096]{0}', space=vmem, size = 0x1000, scoped, tag = 'output window, operand 0, single buffered']
    %12 = vsyncpa [#allocation3], 0
    %13 = vsyncpa [#allocation6], 0
    %14 = vsyncpa [#allocation9], 0
    %15 = vsyncpa [#allocation4], 0
    // Predicated region
    $region2: #{tpu_custom_call.1} parent=1 // pred_check
      _
    $region3: #{tpu_custom_call.1} parent=1 // pred_check_branch
      %17 = sbr.rel (0) target = $region5
    $region4: #{tpu_custom_call.1} parent=1 // pred_region
      %s19 = ssub.s32 256, 256
      %20 = vsyncadd [#allocation3], %s19
      %s21 = sshll.u32 [#allocation2], 4
      %s22 = int_to_ptr.vmem [resolvable:$true] %s21
      %27 = dma.hbm_to_vmem [thread:$0]  %s0, 256, %s22, [#allocation3], 128, 128, 8
    $region5: #{tpu_custom_call.1} parent=1 // pred_fallthru
      _
    // Predicated region
    $region6: #{tpu_custom_call.1} parent=1 // pred_check
      _
    $region7: #{tpu_custom_call.1} parent=1 // pred_check_branch
      %29 = sbr.rel (0) target = $region9
    $region8: #{tpu_custom_call.1} parent=1 // pred_region
      %s31 = ssub.s32 1024, 1024
      %32 = vsyncadd [#allocation6], %s31
      %s33 = sshll.u32 [#allocation5], 4
      %s34 = int_to_ptr.vmem [resolvable:$true] %s33
      %39 = dma.hbm_to_vmem [thread:$0]  %s1, 1024, %s34, [#allocation6], 64, 64, 4
    $region9: #{tpu_custom_call.1} parent=1 // pred_fallthru
      _
    // Predicated region
    $region10: #{tpu_custom_call.1} parent=1 // pred_check
      _
    $region11: #{tpu_custom_call.1} parent=1 // pred_check_branch
      %41 = sbr.rel (0) target = $region13
    $region12: #{tpu_custom_call.1} parent=1 // pred_region
      _
    $region13: #{tpu_custom_call.1} parent=1 // pred_fallthru
      _
    // Predicated region
    $region14: #{tpu_custom_call.1} parent=1 // pred_check
      _
    $region15: #{tpu_custom_call.1} parent=1 // pred_check_branch
      %43 = sbr.rel (0) target = $region17
    $region16: #{tpu_custom_call.1} parent=1 // pred_region
      %s45 = ssub.s32 1024, 1024
      %46 = vsyncadd [#allocation6], %s45
      %s47 = sshll.u32 [#allocation7], 4
      %s48 = int_to_ptr.vmem [resolvable:$true] %s47
      %53 = dma.hbm_to_vmem [thread:$0]  %s3, 1024, %s48, [#allocation6], 64, 64, 4
    $region17: #{tpu_custom_call.1} parent=1 // pred_fallthru
      _
    // Predicated region
    $region18: #{tpu_custom_call.1} parent=1 // pred_check
      _
    $region19: #{tpu_custom_call.1} parent=1 // pred_check_branch
      %55 = sbr.rel (0) target = $region21
    $region20: #{tpu_custom_call.1} parent=1 // pred_region
      _
    $region21: #{tpu_custom_call.1} parent=1 // pred_fallthru
      _
    // Predicated region
    $region22: #{tpu_custom_call.1} parent=1 // pred_check
      _
    $region23: #{tpu_custom_call.1} parent=1 // pred_check_branch
      %57 = sbr.rel (0) target = $region25
    $region24: #{tpu_custom_call.1} parent=1 // pred_region
      %s59 = ssub.s32 1024, 1024
      %60 = vsyncadd [#allocation9], %s59
      %s61 = sshll.u32 [#allocation8], 4
      %s62 = int_to_ptr.vmem [resolvable:$true] %s61
      %67 = dma.hbm_to_vmem [thread:$0]  %s5, 1024, %s62, [#allocation9], 64, 64, 4
    $region25: #{tpu_custom_call.1} parent=1 // pred_fallthru
      _
    // Predicated region
    $region26: #{tpu_custom_call.1} parent=1 // pred_check
      _
    $region27: #{tpu_custom_call.1} parent=1 // pred_check_branch
      %69 = sbr.rel (0) target = $region29
    $region28: #{tpu_custom_call.1} parent=1 // pred_region
      _
    $region29: #{tpu_custom_call.1} parent=1 // pred_fallthru
      _
    // Predicated region
    $region30: #{tpu_custom_call.1} parent=1 // pred_check
      _
    $region31: #{tpu_custom_call.1} parent=1 // pred_check_branch
      %71 = sbr.rel (0) target = $region33
    $region32: #{tpu_custom_call.1} parent=1 // pred_region
      %72 = dma.done [#allocation3], 256
    $region33: #{tpu_custom_call.1} parent=1 // pred_fallthru
      _
    // Predicated region
    $region34: #{tpu_custom_call.1} parent=1 // pred_check
      _
    $region35: #{tpu_custom_call.1} parent=1 // pred_check_branch
      %74 = sbr.rel (0) target = $region37
    $region36: #{tpu_custom_call.1} parent=1 // pred_region
      %75 = dma.done [#allocation6], 1024
    $region37: #{tpu_custom_call.1} parent=1 // pred_fallthru
      _
    // Predicated region
    $region38: #{tpu_custom_call.1} parent=1 // pred_check
      _
    $region39: #{tpu_custom_call.1} parent=1 // pred_check_branch
      %77 = sbr.rel (0) target = $region41
    $region40: #{tpu_custom_call.1} parent=1 // pred_region
      %78 = dma.done [#allocation6], 1024
    $region41: #{tpu_custom_call.1} parent=1 // pred_fallthru
      _
    // Predicated region
    $region42: #{tpu_custom_call.1} parent=1 // pred_check
      _
    $region43: #{tpu_custom_call.1} parent=1 // pred_check_branch
      %80 = sbr.rel (0) target = $region45
    $region44: #{tpu_custom_call.1} parent=1 // pred_region
      %81 = dma.done [#allocation9], 1024
    $region45: #{tpu_custom_call.1} parent=1 // pred_fallthru
      _
    %v83 = vld [vmem:[#allocation2] sm:$0xff]
    %v84 = vld [vmem:[#allocation2 + $0x8] sm:$0xff]
    %v85 = vpack.c.bf16 %v84, %v83
    %v86 = vld [vmem:[#allocation5] sm:$0xf]
    %v87 = vld [vmem:[#allocation5 + $0x4] sm:$0xf]
    %v88 = vld [vmem:[#allocation5 + $0x8] sm:$0xf]
    %v89 = vld [vmem:[#allocation5 + $0xc] sm:$0xf]
    %v90 = vld [vmem:[#allocation5 + $0x10] sm:$0xf]
    %v91 = vld [vmem:[#allocation5 + $0x14] sm:$0xf]
    %v92 = vld [vmem:[#allocation5 + $0x18] sm:$0xf]
    %v93 = vld [vmem:[#allocation5 + $0x1c] sm:$0xf]
    %v94 = vld [vmem:[#allocation5 + $0x20] sm:$0xf]
    %v95 = vld [vmem:[#allocation5 + $0x24] sm:$0xf]
    %v96 = vld [vmem:[#allocation5 + $0x28] sm:$0xf]
    %v97 = vld [vmem:[#allocation5 + $0x2c] sm:$0xf]
    %v98 = vld [vmem:[#allocation5 + $0x30] sm:$0xf]
    %v99 = vld [vmem:[#allocation5 + $0x34] sm:$0xf]
    %v100 = vld [vmem:[#allocation5 + $0x38] sm:$0xf]
    %v101 = vld [vmem:[#allocation5 + $0x3c] sm:$0xf]
    %v102 = vld [vmem:[%s2] sm:$0x1]
    %v104 = vlaneseq
    %v105 = vshrl.u32 %v104, 7
    %v106 = vsub.s32 0, %v105
    %v107 = vrot.slane %v102, %v106
    %v125 = vunpack.c.l.b16 %v86
    %v126 = vunpack.c.l.b16 %v87
    %v127 = vunpack.c.l.b16 %v88
    %v128 = vunpack.c.l.b16 %v89
    %v129 = vunpack.c.l.b16 %v90
    %v130 = vunpack.c.l.b16 %v91
    %v131 = vunpack.c.l.b16 %v92
    %v132 = vunpack.c.l.b16 %v93
    %v133 = vunpack.c.l.b16 %v94
    %v134 = vunpack.c.l.b16 %v95
    %v135 = vunpack.c.l.b16 %v96
    %v136 = vunpack.c.l.b16 %v97
    %v137 = vunpack.c.l.b16 %v98
    %v138 = vunpack.c.l.b16 %v99
    %v139 = vunpack.c.l.b16 %v100
    %v140 = vunpack.c.l.b16 %v101
    %v141 = vpack.c.b16 %v126, %v125
    %v142 = vpack.c.b16 %v128, %v127
    %v143 = vpack.c.b16 %v130, %v129
    %v144 = vpack.c.b16 %v132, %v131
    %v145 = vpack.c.b16 %v134, %v133
    %v146 = vpack.c.b16 %v136, %v135
    %v147 = vpack.c.b16 %v138, %v137
    %v148 = vpack.c.b16 %v140, %v139
    %157 = vmatprep.subr.bf16.mxu0 0
    %158 = vmatpush1.bf16.msra.mxu0 %v141
    %159 = vmatprep.subr.bf16.mxu0 0
    %160 = vmatpush1.bf16.msra.mxu0 %v142
    %161 = vmatprep.subr.bf16.mxu0 0
    %162 = vmatpush1.bf16.msra.mxu0 %v143
    %163 = vmatprep.subr.bf16.mxu0 0
    %164 = vmatpush1.bf16.msra.mxu0 %v144
    %165 = vmatprep.subr.bf16.mxu0 0
    %166 = vmatpush1.bf16.msra.mxu0 %v145
    %167 = vmatprep.subr.bf16.mxu0 0
    %168 = vmatpush1.bf16.msra.mxu0 %v146
    %169 = vmatprep.subr.bf16.mxu0 0
    %170 = vmatpush1.bf16.msra.mxu0 %v147
    %171 = vmatprep.subr.bf16.mxu0 0
    %172 = vmatpush1.bf16.msra.mxu0 %v148
    %173 = vmatprep.subr.bf16.mxu0 0
    %174 = vmatpush1.bf16.msra.mxu0 0
    %175 = vmatprep.subr.bf16.mxu0 0
    %176 = vmatpush1.bf16.msra.mxu0 0
    %177 = vmatprep.subr.bf16.mxu0 0
    %178 = vmatpush1.bf16.msra.mxu0 0
    %179 = vmatprep.subr.bf16.mxu0 0
    %180 = vmatpush1.bf16.msra.mxu0 0
    %181 = vmatprep.subr.bf16.mxu0 0
    %182 = vmatpush1.bf16.msra.mxu0 0
    %183 = vmatprep.subr.bf16.mxu0 0
    %184 = vmatpush1.bf16.msra.mxu0 0
    %185 = vmatprep.subr.bf16.mxu0 0
    %186 = vmatpush1.bf16.msra.mxu0 0
    %187 = vmatprep.subr.bf16.mxu0 0
    %188 = vmatpush1.bf16.msra.mxu0 0
    %189 = vmatprep.mubr.bf16.mxu0 0
    %190 = vmatmul.mubr.bf16.gmra.mrb[0].mxu0 %v85
    %v191 = vpop.f32.mrb[0].mxu0
    %v192 = vadd.f32 %v107, %v191
    %v193 = vpop.f32.mrb[0].mxu0
    %v194 = vpop.f32.mrb[0].mxu0
    %v195 = vadd.f32 %v107, %v194
    %v196 = vpop.f32.mrb[0].mxu0
    %197 = vdwg.mxu0
    %v198 = vsub.f32 0.0, %v192
    %v199 = vsub.f32 0.0, %v195
    %v200 = vmul.f32 %v198, 1.442695
    %v201 = vpow.pop %v200
    %v202 = vmul.f32 %v199, 1.442695
    %v203 = vpow.pop %v202
    %v204 = vadd.f32 %v201, 1.0
    %v205 = vadd.f32 %v203, 1.0
    %v206 = vrcp.pop %v204
    %v207 = vrcp.pop %v205
    %v208 = vpack.c.bf16 %v207, %v206
    %v209 = vld [vmem:[#allocation7] sm:$0xf]
    %v210 = vld [vmem:[#allocation7 + $0x4] sm:$0xf]
    %v211 = vld [vmem:[#allocation7 + $0x8] sm:$0xf]
    %v212 = vld [vmem:[#allocation7 + $0xc] sm:$0xf]
    %v213 = vld [vmem:[#allocation7 + $0x10] sm:$0xf]
    %v214 = vld [vmem:[#allocation7 + $0x14] sm:$0xf]
    %v215 = vld [vmem:[#allocation7 + $0x18] sm:$0xf]
    %v216 = vld [vmem:[#allocation7 + $0x1c] sm:$0xf]
    %v217 = vld [vmem:[#allocation7 + $0x20] sm:$0xf]
    %v218 = vld [vmem:[#allocation7 + $0x24] sm:$0xf]
    %v219 = vld [vmem:[#allocation7 + $0x28] sm:$0xf]
    %v220 = vld [vmem:[#allocation7 + $0x2c] sm:$0xf]
    %v221 = vld [vmem:[#allocation7 + $0x30] sm:$0xf]
    %v222 = vld [vmem:[#allocation7 + $0x34] sm:$0xf]
    %v223 = vld [vmem:[#allocation7 + $0x38] sm:$0xf]
    %v224 = vld [vmem:[#allocation7 + $0x3c] sm:$0xf]
    %v225 = vld [vmem:[%s4] sm:$0x1]
    %v227 = vlaneseq
    %v228 = vshrl.u32 %v227, 7
    %v229 = vsub.s32 0, %v228
    %v230 = vrot.slane %v225, %v229
    %v248 = vunpack.c.l.b16 %v209
    %v249 = vunpack.c.l.b16 %v210
    %v250 = vunpack.c.l.b16 %v211
    %v251 = vunpack.c.l.b16 %v212
    %v252 = vunpack.c.l.b16 %v213
    %v253 = vunpack.c.l.b16 %v214
    %v254 = vunpack.c.l.b16 %v215
    %v255 = vunpack.c.l.b16 %v216
    %v256 = vunpack.c.l.b16 %v217
    %v257 = vunpack.c.l.b16 %v218
    %v258 = vunpack.c.l.b16 %v219
    %v259 = vunpack.c.l.b16 %v220
    %v260 = vunpack.c.l.b16 %v221
    %v261 = vunpack.c.l.b16 %v222
    %v262 = vunpack.c.l.b16 %v223
    %v263 = vunpack.c.l.b16 %v224
    %v264 = vpack.c.b16 %v249, %v248
    %v265 = vpack.c.b16 %v251, %v250
    %v266 = vpack.c.b16 %v253, %v252
    %v267 = vpack.c.b16 %v255, %v254
    %v268 = vpack.c.b16 %v257, %v256
    %v269 = vpack.c.b16 %v259, %v258
    %v270 = vpack.c.b16 %v261, %v260
    %v271 = vpack.c.b16 %v263, %v262
    %280 = vmatprep.subr.bf16.mxu0 0
    %281 = vmatpush1.bf16.msra.mxu0 %v264
    %282 = vmatprep.subr.bf16.mxu0 0
    %283 = vmatpush1.bf16.msra.mxu0 %v265
    %284 = vmatprep.subr.bf16.mxu0 0
    %285 = vmatpush1.bf16.msra.mxu0 %v266
    %286 = vmatprep.subr.bf16.mxu0 0
    %287 = vmatpush1.bf16.msra.mxu0 %v267
    %288 = vmatprep.subr.bf16.mxu0 0
    %289 = vmatpush1.bf16.msra.mxu0 %v268
    %290 = vmatprep.subr.bf16.mxu0 0
    %291 = vmatpush1.bf16.msra.mxu0 %v269
    %292 = vmatprep.subr.bf16.mxu0 0
    %293 = vmatpush1.bf16.msra.mxu0 %v270
    %294 = vmatprep.subr.bf16.mxu0 0
    %295 = vmatpush1.bf16.msra.mxu0 %v271
    %296 = vmatprep.subr.bf16.mxu0 0
    %297 = vmatpush1.bf16.msra.mxu0 0
    %298 = vmatprep.subr.bf16.mxu0 0
    %299 = vmatpush1.bf16.msra.mxu0 0
    %300 = vmatprep.subr.bf16.mxu0 0
    %301 = vmatpush1.bf16.msra.mxu0 0
    %302 = vmatprep.subr.bf16.mxu0 0
    %303 = vmatpush1.bf16.msra.mxu0 0
    %304 = vmatprep.subr.bf16.mxu0 0
    %305 = vmatpush1.bf16.msra.mxu0 0
    %306 = vmatprep.subr.bf16.mxu0 0
    %307 = vmatpush1.bf16.msra.mxu0 0
    %308 = vmatprep.subr.bf16.mxu0 0
    %309 = vmatpush1.bf16.msra.mxu0 0
    %310 = vmatprep.subr.bf16.mxu0 0
    %311 = vmatpush1.bf16.msra.mxu0 0
    %312 = vmatprep.mubr.bf16.mxu0 0
    %313 = vmatmul.mubr.bf16.gmra.mrb[0].mxu0 %v208
    %v314 = vpop.f32.mrb[0].mxu0
    %v315 = vadd.f32 %v230, %v314
    %v316 = vpop.f32.mrb[0].mxu0
    %v317 = vpop.f32.mrb[0].mxu0
    %v318 = vadd.f32 %v230, %v317
    %v319 = vpop.f32.mrb[0].mxu0
    %320 = vdwg.mxu0
    %v321 = vsub.f32 0.0, %v315
    %v322 = vsub.f32 0.0, %v318
    %v323 = vmul.f32 %v321, 1.442695
    %v324 = vpow.pop %v323
    %v325 = vmul.f32 %v322, 1.442695
    %v326 = vpow.pop %v325
    %v327 = vadd.f32 %v324, 1.0
    %v328 = vadd.f32 %v326, 1.0
    %v329 = vrcp.pop %v327
    %v330 = vrcp.pop %v328
    %v331 = vpack.c.bf16 %v330, %v329
    %v332 = vld [vmem:[#allocation8] sm:$0xf]
    %v333 = vld [vmem:[#allocation8 + $0x4] sm:$0xf]
    %v334 = vld [vmem:[#allocation8 + $0x8] sm:$0xf]
    %v335 = vld [vmem:[#allocation8 + $0xc] sm:$0xf]
    %v336 = vld [vmem:[#allocation8 + $0x10] sm:$0xf]
    %v337 = vld [vmem:[#allocation8 + $0x14] sm:$0xf]
    %v338 = vld [vmem:[#allocation8 + $0x18] sm:$0xf]
    %v339 = vld [vmem:[#allocation8 + $0x1c] sm:$0xf]
    %v340 = vld [vmem:[#allocation8 + $0x20] sm:$0xf]
    %v341 = vld [vmem:[#allocation8 + $0x24] sm:$0xf]
    %v342 = vld [vmem:[#allocation8 + $0x28] sm:$0xf]
    %v343 = vld [vmem:[#allocation8 + $0x2c] sm:$0xf]
    %v344 = vld [vmem:[#allocation8 + $0x30] sm:$0xf]
    %v345 = vld [vmem:[#allocation8 + $0x34] sm:$0xf]
    %v346 = vld [vmem:[#allocation8 + $0x38] sm:$0xf]
    %v347 = vld [vmem:[#allocation8 + $0x3c] sm:$0xf]
    %v348 = vld [vmem:[%s6] sm:$0x1]
    %v350 = vlaneseq
    %v351 = vshrl.u32 %v350, 7
    %v352 = vsub.s32 0, %v351
    %v353 = vrot.slane %v348, %v352
    %v371 = vunpack.c.l.b16 %v332
    %v372 = vunpack.c.l.b16 %v333
    %v373 = vunpack.c.l.b16 %v334
    %v374 = vunpack.c.l.b16 %v335
    %v375 = vunpack.c.l.b16 %v336
    %v376 = vunpack.c.l.b16 %v337
    %v377 = vunpack.c.l.b16 %v338
    %v378 = vunpack.c.l.b16 %v339
    %v379 = vunpack.c.l.b16 %v340
    %v380 = vunpack.c.l.b16 %v341
    %v381 = vunpack.c.l.b16 %v342
    %v382 = vunpack.c.l.b16 %v343
    %v383 = vunpack.c.l.b16 %v344
    %v384 = vunpack.c.l.b16 %v345
    %v385 = vunpack.c.l.b16 %v346
    %v386 = vunpack.c.l.b16 %v347
    %v387 = vpack.c.b16 %v372, %v371
    %v388 = vpack.c.b16 %v374, %v373
    %v389 = vpack.c.b16 %v376, %v375
    %v390 = vpack.c.b16 %v378, %v377
    %v391 = vpack.c.b16 %v380, %v379
    %v392 = vpack.c.b16 %v382, %v381
    %v393 = vpack.c.b16 %v384, %v383
    %v394 = vpack.c.b16 %v386, %v385
    %403 = vmatprep.subr.bf16.mxu0 0
    %404 = vmatpush1.bf16.msra.mxu0 %v387
    %405 = vmatprep.subr.bf16.mxu0 0
    %406 = vmatpush1.bf16.msra.mxu0 %v388
    %407 = vmatprep.subr.bf16.mxu0 0
    %408 = vmatpush1.bf16.msra.mxu0 %v389
    %409 = vmatprep.subr.bf16.mxu0 0
    %410 = vmatpush1.bf16.msra.mxu0 %v390
    %411 = vmatprep.subr.bf16.mxu0 0
    %412 = vmatpush1.bf16.msra.mxu0 %v391
    %413 = vmatprep.subr.bf16.mxu0 0
    %414 = vmatpush1.bf16.msra.mxu0 %v392
    %415 = vmatprep.subr.bf16.mxu0 0
    %416 = vmatpush1.bf16.msra.mxu0 %v393
    %417 = vmatprep.subr.bf16.mxu0 0
    %418 = vmatpush1.bf16.msra.mxu0 %v394
    %419 = vmatprep.subr.bf16.mxu0 0
    %420 = vmatpush1.bf16.msra.mxu0 0
    %421 = vmatprep.subr.bf16.mxu0 0
    %422 = vmatpush1.bf16.msra.mxu0 0
    %423 = vmatprep.subr.bf16.mxu0 0
    %424 = vmatpush1.bf16.msra.mxu0 0
    %425 = vmatprep.subr.bf16.mxu0 0
    %426 = vmatpush1.bf16.msra.mxu0 0
    %427 = vmatprep.subr.bf16.mxu0 0
    %428 = vmatpush1.bf16.msra.mxu0 0
    %429 = vmatprep.subr.bf16.mxu0 0
    %430 = vmatpush1.bf16.msra.mxu0 0
    %431 = vmatprep.subr.bf16.mxu0 0
    %432 = vmatpush1.bf16.msra.mxu0 0
    %433 = vmatprep.subr.bf16.mxu0 0
    %434 = vmatpush1.bf16.msra.mxu0 0
    %435 = vmatprep.mubr.bf16.mxu0 0
    %436 = vmatmul.mubr.bf16.gmra.mrb[0].mxu0 %v331
    %v437 = vpop.f32.mrb[0].mxu0
    %v438 = vadd.f32 %v353, %v437
    %v439 = vpop.f32.mrb[0].mxu0
    %v440 = vpop.f32.mrb[0].mxu0
    %v441 = vadd.f32 %v353, %v440
    %v442 = vpop.f32.mrb[0].mxu0
    %443 = vdwg.mxu0
    %v444 = vsub.f32 0.0, %v438
    %v445 = vsub.f32 0.0, %v441
    %v446 = vmul.f32 %v444, 1.442695
    %v447 = vpow.pop %v446
    %v448 = vmul.f32 %v445, 1.442695
    %v449 = vpow.pop %v448
    %v450 = vadd.f32 %v447, 1.0
    %v451 = vadd.f32 %v449, 1.0
    %v452 = vrcp.pop %v450
    %v453 = vrcp.pop %v451
    %v454 = vpack.c.bf16 %v453, %v452
    %v456 = vunpack.c.l.b16 %v454
    %v457 = vunpack.c.h.b16 %v454
    %v458 = vpack.c.b16 %v456, %v456
    %v459 = vpack.c.b16 %v457, %v457
    %462 = vst [vmem:[#allocation10] sm:$0xf] %v458
    %463 = vst [vmem:[#allocation10 + $0x4] sm:$0xf] %v459
    // Predicated region
    $region46: #{tpu_custom_call.1} parent=1 // pred_check
      _
    $region47: #{tpu_custom_call.1} parent=1 // pred_check_branch
      %465 = sbr.rel (0) target = $region49
    $region48: #{tpu_custom_call.1} parent=1 // pred_region
      %s467 = ssub.s32 128, 128
      %468 = vsyncadd [#allocation4], %s467
      %s469 = sshll.u32 [#allocation10], 4
      %s470 = int_to_ptr.vmem [resolvable:$true] %s469
      %475 = dma.vmem_to_hbm [thread:$0]  %s470, 128, %s7, [#allocation4], 64, 64, 4
    $region49: #{tpu_custom_call.1} parent=1 // pred_fallthru
      _
    // Predicated region
    $region50: #{tpu_custom_call.1} parent=1 // pred_check
      _
    $region51: #{tpu_custom_call.1} parent=1 // pred_check_branch
      %477 = sbr.rel (0) target = $region53
    $region52: #{tpu_custom_call.1} parent=1 // pred_region
      %478 = dma.done [#allocation4], 128
    $region53: #{tpu_custom_call.1} parent=1 // pred_fallthru
      _
    %479 = vsyncpa [#allocation3], 1
    %480 = vsyncpa [#allocation6], 1
    %481 = vsyncpa [#allocation9], 1
    %482 = vsyncpa [#allocation4], 1

// kernel: tpu_custom_call.1
$region0: #{tpu_custom_call.1}
  #allocation0 [shape = 'u32[]', space=smem, size = 0x4, offset = 0x4, fixed_abs, tag = 'smem constant byte address 0x4 - core index']
  #allocation1 [shape = 'u32[144,128]{1,0:T(1,128)}', space=vmem, size = 0x12000, scoped, tag = 'internal scratch']
  %s0 = inlined_call_operand.hbm [shape: f32[16,128], index: 0, kind: input, shape index: {}]
  %s1 = inlined_call_operand.hbm [shape: bf16[128,128], index: 1, kind: input, shape index: {}]
  %s2 = inlined_call_operand.vmem [shape: f32[1,128], index: 2, kind: input, shape index: {}]
  %s3 = inlined_call_operand.hbm [shape: bf16[128,128], index: 3, kind: input, shape index: {}]
  %s4 = inlined_call_operand.vmem [shape: f32[1,128], index: 4, kind: input, shape index: {}]
  %s5 = inlined_call_operand.hbm [shape: bf16[128,128], index: 5, kind: input, shape index: {}]
  %s6 = inlined_call_operand.vmem [shape: f32[1,128], index: 6, kind: input, shape index: {}]
  %s7 = inlined_call_operand.hbm [shape: bf16[16,128], index: 7, kind: output, shape index: {}]
  %s8 = sld [smem:[#allocation0]]
  $region54: #{tpu_custom_call.1} parent=0
    _
  %s10 = ssub.s32 1, %s8
  %s11 = scalar_select 0, %s10, %s8
  $region1: #{tpu_custom_call.1} parent=0
    #allocation2 [shape = 'u8[8192]{0}', space=vmem, size = 0x2000, scoped, tag = 'input window, operand 0, single buffered']
    #allocation3 [shape = 's32[1]{0}', space=sflag, size = 0x4, scoped, tag = 'scoped memory for tpu_custom_call.1']
    #allocation4 [shape = 's32[1]{0}', space=sflag, size = 0x4, scoped, tag = 'scoped memory for tpu_custom_call.1']
    #allocation5 [shape = 'u8[32768]{0}', space=vmem, size = 0x8000, scoped, tag = 'input window, operand 1, single buffered']
    #allocation6 [shape = 's32[1]{0}', space=sflag, size = 0x4, scoped, tag = 'scoped memory for tpu_custom_call.1']
    #allocation7 [shape = 'u8[32768]{0}', space=vmem, size = 0x8000, scoped, tag = 'input window, operand 3, single buffered']
    #allocation8 [shape = 'u8[32768]{0}', space=vmem, size = 0x8000, scoped, tag = 'input window, operand 5, single buffered']
    #allocation9 [shape = 's32[1]{0}', space=sflag, size = 0x4, scoped, tag = 'scoped memory for tpu_custom_call.1']
    #allocation10 [shape = 'u8[4096]{0}', space=vmem, size = 0x1000, scoped, tag = 'output window, operand 0, single buffered']
    %12 = vsyncpa [#allocation3], 0
    %13 = vsyncpa [#allocation6], 0
    %14 = vsyncpa [#allocation9], 0
    %15 = vsyncpa [#allocation4], 0
    // Predicated region
    $region2: #{tpu_custom_call.1} parent=1 // pred_check
      _
    $region3: #{tpu_custom_call.1} parent=1 // pred_check_branch
      %17 = sbr.rel (0) target = $region5
    $region4: #{tpu_custom_call.1} parent=1 // pred_region
      %s19 = ssub.s32 256, 256
      %20 = vsyncadd [#allocation3], %s19
      %s21 = sshll.u32 [#allocation2], 4
      %s22 = int_to_ptr.vmem [resolvable:$true] %s21
      %27 = dma.hbm_to_vmem [thread:$0]  %s0, 256, %s22, [#allocation3], 128, 128, 8
    $region5: #{tpu_custom_call.1} parent=1 // pred_fallthru
      _
    // Predicated region
    $region6: #{tpu_custom_call.1} parent=1 // pred_check
      _
    $region7: #{tpu_custom_call.1} parent=1 // pred_check_branch
      %29 = sbr.rel (0) target = $region9
    $region8: #{tpu_custom_call.1} parent=1 // pred_region
      %s31 = ssub.s32 1024, 1024
      %32 = vsyncadd [#allocation6], %s31
      %s33 = sshll.u32 [#allocation5], 4
      %s34 = int_to_ptr.vmem [resolvable:$true] %s33
      %39 = dma.hbm_to_vmem [thread:$0]  %s1, 1024, %s34, [#allocation6], 64, 64, 4
    $region9: #{tpu_custom_call.1} parent=1 // pred_fallthru
      _
    // Predicated region
    $region10: #{tpu_custom_call.1} parent=1 // pred_check
      _
    $region11: #{tpu_custom_call.1} parent=1 // pred_check_branch
      %41 = sbr.rel (0) target = $region13
    $region12: #{tpu_custom_call.1} parent=1 // pred_region
      _
    $region13: #{tpu_custom_call.1} parent=1 // pred_fallthru
      _
    // Predicated region
    $region14: #{tpu_custom_call.1} parent=1 // pred_check
      _
    $region15: #{tpu_custom_call.1} parent=1 // pred_check_branch
      %43 = sbr.rel (0) target = $region17
    $region16: #{tpu_custom_call.1} parent=1 // pred_region
      %s45 = ssub.s32 1024, 1024
      %46 = vsyncadd [#allocation6], %s45
      %s47 = sshll.u32 [#allocation7], 4
      %s48 = int_to_ptr.vmem [resolvable:$true] %s47
      %53 = dma.hbm_to_vmem [thread:$0]  %s3, 1024, %s48, [#allocation6], 64, 64, 4
    $region17: #{tpu_custom_call.1} parent=1 // pred_fallthru
      _
    // Predicated region
    $region18: #{tpu_custom_call.1} parent=1 // pred_check
      _
    $region19: #{tpu_custom_call.1} parent=1 // pred_check_branch
      %55 = sbr.rel (0) target = $region21
    $region20: #{tpu_custom_call.1} parent=1 // pred_region
      _
    $region21: #{tpu_custom_call.1} parent=1 // pred_fallthru
      _
    // Predicated region
    $region22: #{tpu_custom_call.1} parent=1 // pred_check
      _
    $region23: #{tpu_custom_call.1} parent=1 // pred_check_branch
      %57 = sbr.rel (0) target = $region25
    $region24: #{tpu_custom_call.1} parent=1 // pred_region
      %s59 = ssub.s32 1024, 1024
      %60 = vsyncadd [#allocation9], %s59
      %s61 = sshll.u32 [#allocation8], 4
      %s62 = int_to_ptr.vmem [resolvable:$true] %s61
      %67 = dma.hbm_to_vmem [thread:$0]  %s5, 1024, %s62, [#allocation9], 64, 64, 4
    $region25: #{tpu_custom_call.1} parent=1 // pred_fallthru
      _
    // Predicated region
    $region26: #{tpu_custom_call.1} parent=1 // pred_check
      _
    $region27: #{tpu_custom_call.1} parent=1 // pred_check_branch
      %69 = sbr.rel (0) target = $region29
    $region28: #{tpu_custom_call.1} parent=1 // pred_region
      _
    $region29: #{tpu_custom_call.1} parent=1 // pred_fallthru
      _
    // Predicated region
    $region30: #{tpu_custom_call.1} parent=1 // pred_check
      _
    $region31: #{tpu_custom_call.1} parent=1 // pred_check_branch
      %71 = sbr.rel (0) target = $region33
    $region32: #{tpu_custom_call.1} parent=1 // pred_region
      %72 = dma.done [#allocation3], 256
    $region33: #{tpu_custom_call.1} parent=1 // pred_fallthru
      _
    // Predicated region
    $region34: #{tpu_custom_call.1} parent=1 // pred_check
      _
    $region35: #{tpu_custom_call.1} parent=1 // pred_check_branch
      %74 = sbr.rel (0) target = $region37
    $region36: #{tpu_custom_call.1} parent=1 // pred_region
      %75 = dma.done [#allocation6], 1024
    $region37: #{tpu_custom_call.1} parent=1 // pred_fallthru
      _
    // Predicated region
    $region38: #{tpu_custom_call.1} parent=1 // pred_check
      _
    $region39: #{tpu_custom_call.1} parent=1 // pred_check_branch
      %77 = sbr.rel (0) target = $region41
    $region40: #{tpu_custom_call.1} parent=1 // pred_region
      %78 = dma.done [#allocation6], 1024
    $region41: #{tpu_custom_call.1} parent=1 // pred_fallthru
      _
    // Predicated region
    $region42: #{tpu_custom_call.1} parent=1 // pred_check
      _
    $region43: #{tpu_custom_call.1} parent=1 // pred_check_branch
      %80 = sbr.rel (0) target = $region45
    $region44: #{tpu_custom_call.1} parent=1 // pred_region
      %81 = dma.done [#allocation9], 1024
    $region45: #{tpu_custom_call.1} parent=1 // pred_fallthru
      _
    %v83 = vld [vmem:[#allocation2] sm:$0xff]
    %v84 = vld [vmem:[#allocation2 + $0x8] sm:$0xff]
    %v85 = vpack.c.bf16 %v84, %v83
    %v86 = vld [vmem:[#allocation5] sm:$0xf]
    %v87 = vld [vmem:[#allocation5 + $0x4] sm:$0xf]
    %v88 = vld [vmem:[#allocation5 + $0x8] sm:$0xf]
    %v89 = vld [vmem:[#allocation5 + $0xc] sm:$0xf]
    %v90 = vld [vmem:[#allocation5 + $0x10] sm:$0xf]
    %v91 = vld [vmem:[#allocation5 + $0x14] sm:$0xf]
    %v92 = vld [vmem:[#allocation5 + $0x18] sm:$0xf]
    %v93 = vld [vmem:[#allocation5 + $0x1c] sm:$0xf]
    %v94 = vld [vmem:[#allocation5 + $0x20] sm:$0xf]
    %v95 = vld [vmem:[#allocation5 + $0x24] sm:$0xf]
    %v96 = vld [vmem:[#allocation5 + $0x28] sm:$0xf]
    %v97 = vld [vmem:[#allocation5 + $0x2c] sm:$0xf]
    %v98 = vld [vmem:[#allocation5 + $0x30] sm:$0xf]
    %v99 = vld [vmem:[#allocation5 + $0x34] sm:$0xf]
    %v100 = vld [vmem:[#allocation5 + $0x38] sm:$0xf]
    %v101 = vld [vmem:[#allocation5 + $0x3c] sm:$0xf]
    %v102 = vld [vmem:[%s2] sm:$0x1]
    %v104 = vlaneseq
    %v105 = vshrl.u32 %v104, 7
    %v106 = vsub.s32 0, %v105
    %v107 = vrot.slane %v102, %v106
    %v125 = vunpack.c.l.b16 %v86
    %v126 = vunpack.c.l.b16 %v87
    %v127 = vunpack.c.l.b16 %v88
    %v128 = vunpack.c.l.b16 %v89
    %v129 = vunpack.c.l.b16 %v90
    %v130 = vunpack.c.l.b16 %v91
    %v131 = vunpack.c.l.b16 %v92
    %v132 = vunpack.c.l.b16 %v93
    %v133 = vunpack.c.l.b16 %v94
    %v134 = vunpack.c.l.b16 %v95
    %v135 = vunpack.c.l.b16 %v96
    %v136 = vunpack.c.l.b16 %v97
    %v137 = vunpack.c.l.b16 %v98
    %v138 = vunpack.c.l.b16 %v99
    %v139 = vunpack.c.l.b16 %v100
    %v140 = vunpack.c.l.b16 %v101
    %v141 = vpack.c.b16 %v126, %v125
    %v142 = vpack.c.b16 %v128, %v127
    %v143 = vpack.c.b16 %v130, %v129
    %v144 = vpack.c.b16 %v132, %v131
    %v145 = vpack.c.b16 %v134, %v133
    %v146 = vpack.c.b16 %v136, %v135
    %v147 = vpack.c.b16 %v138, %v137
    %v148 = vpack.c.b16 %v140, %v139
    %157 = vmatprep.subr.bf16.mxu0 0
    %158 = vmatpush1.bf16.msra.mxu0 %v141
    %159 = vmatprep.subr.bf16.mxu0 0
    %160 = vmatpush1.bf16.msra.mxu0 %v142
    %161 = vmatprep.subr.bf16.mxu0 0
    %162 = vmatpush1.bf16.msra.mxu0 %v143
    %163 = vmatprep.subr.bf16.mxu0 0
    %164 = vmatpush1.bf16.msra.mxu0 %v144
    %165 = vmatprep.subr.bf16.mxu0 0
    %166 = vmatpush1.bf16.msra.mxu0 %v145
    %167 = vmatprep.subr.bf16.mxu0 0
    %168 = vmatpush1.bf16.msra.mxu0 %v146
    %169 = vmatprep.subr.bf16.mxu0 0
    %170 = vmatpush1.bf16.msra.mxu0 %v147
    %171 = vmatprep.subr.bf16.mxu0 0
    %172 = vmatpush1.bf16.msra.mxu0 %v148
    %173 = vmatprep.subr.bf16.mxu0 0
    %174 = vmatpush1.bf16.msra.mxu0 0
    %175 = vmatprep.subr.bf16.mxu0 0
    %176 = vmatpush1.bf16.msra.mxu0 0
    %177 = vmatprep.subr.bf16.mxu0 0
    %178 = vmatpush1.bf16.msra.mxu0 0
    %179 = vmatprep.subr.bf16.mxu0 0
    %180 = vmatpush1.bf16.msra.mxu0 0
    %181 = vmatprep.subr.bf16.mxu0 0
    %182 = vmatpush1.bf16.msra.mxu0 0
    %183 = vmatprep.subr.bf16.mxu0 0
    %184 = vmatpush1.bf16.msra.mxu0 0
    %185 = vmatprep.subr.bf16.mxu0 0
    %186 = vmatpush1.bf16.msra.mxu0 0
    %187 = vmatprep.subr.bf16.mxu0 0
    %188 = vmatpush1.bf16.msra.mxu0 0
    %189 = vmatprep.mubr.bf16.mxu0 0
    %190 = vmatmul.mubr.bf16.gmra.mrb[0].mxu0 %v85
    %v191 = vpop.f32.mrb[0].mxu0
    %v192 = vadd.f32 %v107, %v191
    %v193 = vpop.f32.mrb[0].mxu0
    %v194 = vpop.f32.mrb[0].mxu0
    %v195 = vadd.f32 %v107, %v194
    %v196 = vpop.f32.mrb[0].mxu0
    %197 = vdwg.mxu0
    %v198 = vsub.f32 0.0, %v192
    %v199 = vsub.f32 0.0, %v195
    %v200 = vmul.f32 %v198, 1.442695
    %v201 = vpow.pop %v200
    %v202 = vmul.f32 %v199, 1.442695
    %v203 = vpow.pop %v202
    %v204 = vadd.f32 %v201, 1.0
    %v205 = vadd.f32 %v203, 1.0
    %v206 = vrcp.pop %v204
    %v207 = vrcp.pop %v205
    %v208 = vpack.c.bf16 %v207, %v206
    %v209 = vld [vmem:[#allocation7] sm:$0xf]
    %v210 = vld [vmem:[#allocation7 + $0x4] sm:$0xf]
    %v211 = vld [vmem:[#allocation7 + $0x8] sm:$0xf]
    %v212 = vld [vmem:[#allocation7 + $0xc] sm:$0xf]
    %v213 = vld [vmem:[#allocation7 + $0x10] sm:$0xf]
    %v214 = vld [vmem:[#allocation7 + $0x14] sm:$0xf]
    %v215 = vld [vmem:[#allocation7 + $0x18] sm:$0xf]
    %v216 = vld [vmem:[#allocation7 + $0x1c] sm:$0xf]
    %v217 = vld [vmem:[#allocation7 + $0x20] sm:$0xf]
    %v218 = vld [vmem:[#allocation7 + $0x24] sm:$0xf]
    %v219 = vld [vmem:[#allocation7 + $0x28] sm:$0xf]
    %v220 = vld [vmem:[#allocation7 + $0x2c] sm:$0xf]
    %v221 = vld [vmem:[#allocation7 + $0x30] sm:$0xf]
    %v222 = vld [vmem:[#allocation7 + $0x34] sm:$0xf]
    %v223 = vld [vmem:[#allocation7 + $0x38] sm:$0xf]
    %v224 = vld [vmem:[#allocation7 + $0x3c] sm:$0xf]
    %v225 = vld [vmem:[%s4] sm:$0x1]
    %v227 = vlaneseq
    %v228 = vshrl.u32 %v227, 7
    %v229 = vsub.s32 0, %v228
    %v230 = vrot.slane %v225, %v229
    %v248 = vunpack.c.l.b16 %v209
    %v249 = vunpack.c.l.b16 %v210
    %v250 = vunpack.c.l.b16 %v211
    %v251 = vunpack.c.l.b16 %v212
    %v252 = vunpack.c.l.b16 %v213
    %v253 = vunpack.c.l.b16 %v214
    %v254 = vunpack.c.l.b16 %v215
    %v255 = vunpack.c.l.b16 %v216
    %v256 = vunpack.c.l.b16 %v217
    %v257 = vunpack.c.l.b16 %v218
    %v258 = vunpack.c.l.b16 %v219
    %v259 = vunpack.c.l.b16 %v220
    %v260 = vunpack.c.l.b16 %v221
    %v261 = vunpack.c.l.b16 %v222
    %v262 = vunpack.c.l.b16 %v223
    %v263 = vunpack.c.l.b16 %v224
    %v264 = vpack.c.b16 %v249, %v248
    %v265 = vpack.c.b16 %v251, %v250
    %v266 = vpack.c.b16 %v253, %v252
    %v267 = vpack.c.b16 %v255, %v254
    %v268 = vpack.c.b16 %v257, %v256
    %v269 = vpack.c.b16 %v259, %v258
    %v270 = vpack.c.b16 %v261, %v260
    %v271 = vpack.c.b16 %v263, %v262
    %280 = vmatprep.subr.bf16.mxu0 0
    %281 = vmatpush1.bf16.msra.mxu0 %v264
    %282 = vmatprep.subr.bf16.mxu0 0
    %283 = vmatpush1.bf16.msra.mxu0 %v265
    %284 = vmatprep.subr.bf16.mxu0 0
    %285 = vmatpush1.bf16.msra.mxu0 %v266
    %286 = vmatprep.subr.bf16.mxu0 0
    %287 = vmatpush1.bf16.msra.mxu0 %v267
    %288 = vmatprep.subr.bf16.mxu0 0
    %289 = vmatpush1.bf16.msra.mxu0 %v268
    %290 = vmatprep.subr.bf16.mxu0 0
    %291 = vmatpush1.bf16.msra.mxu0 %v269
    %292 = vmatprep.subr.bf16.mxu0 0
    %293 = vmatpush1.bf16.msra.mxu0 %v270
    %294 = vmatprep.subr.bf16.mxu0 0
    %295 = vmatpush1.bf16.msra.mxu0 %v271
    %296 = vmatprep.subr.bf16.mxu0 0
    %297 = vmatpush1.bf16.msra.mxu0 0
    %298 = vmatprep.subr.bf16.mxu0 0
    %299 = vmatpush1.bf16.msra.mxu0 0
    %300 = vmatprep.subr.bf16.mxu0 0
    %301 = vmatpush1.bf16.msra.mxu0 0
    %302 = vmatprep.subr.bf16.mxu0 0
    %303 = vmatpush1.bf16.msra.mxu0 0
    %304 = vmatprep.subr.bf16.mxu0 0
    %305 = vmatpush1.bf16.msra.mxu0 0
    %306 = vmatprep.subr.bf16.mxu0 0
    %307 = vmatpush1.bf16.msra.mxu0 0
    %308 = vmatprep.subr.bf16.mxu0 0
    %309 = vmatpush1.bf16.msra.mxu0 0
    %310 = vmatprep.subr.bf16.mxu0 0
    %311 = vmatpush1.bf16.msra.mxu0 0
    %312 = vmatprep.mubr.bf16.mxu0 0
    %313 = vmatmul.mubr.bf16.gmra.mrb[0].mxu0 %v208
    %v314 = vpop.f32.mrb[0].mxu0
    %v315 = vadd.f32 %v230, %v314
    %v316 = vpop.f32.mrb[0].mxu0
    %v317 = vpop.f32.mrb[0].mxu0
    %v318 = vadd.f32 %v230, %v317
    %v319 = vpop.f32.mrb[0].mxu0
    %320 = vdwg.mxu0
    %v321 = vsub.f32 0.0, %v315
    %v322 = vsub.f32 0.0, %v318
    %v323 = vmul.f32 %v321, 1.442695
    %v324 = vpow.pop %v323
    %v325 = vmul.f32 %v322, 1.442695
    %v326 = vpow.pop %v325
    %v327 = vadd.f32 %v324, 1.0
    %v328 = vadd.f32 %v326, 1.0
    %v329 = vrcp.pop %v327
    %v330 = vrcp.pop %v328
    %v331 = vpack.c.bf16 %v330, %v329
    %v332 = vld [vmem:[#allocation8] sm:$0xf]
    %v333 = vld [vmem:[#allocation8 + $0x4] sm:$0xf]
    %v334 = vld [vmem:[#allocation8 + $0x8] sm:$0xf]
    %v335 = vld [vmem:[#allocation8 + $0xc] sm:$0xf]
    %v336 = vld [vmem:[#allocation8 + $0x10] sm:$0xf]
    %v337 = vld [vmem:[#allocation8 + $0x14] sm:$0xf]
    %v338 = vld [vmem:[#allocation8 + $0x18] sm:$0xf]
    %v339 = vld [vmem:[#allocation8 + $0x1c] sm:$0xf]
    %v340 = vld [vmem:[#allocation8 + $0x20] sm:$0xf]
    %v341 = vld [vmem:[#allocation8 + $0x24] sm:$0xf]
    %v342 = vld [vmem:[#allocation8 + $0x28] sm:$0xf]
    %v343 = vld [vmem:[#allocation8 + $0x2c] sm:$0xf]
    %v344 = vld [vmem:[#allocation8 + $0x30] sm:$0xf]
    %v345 = vld [vmem:[#allocation8 + $0x34] sm:$0xf]
    %v346 = vld [vmem:[#allocation8 + $0x38] sm:$0xf]
    %v347 = vld [vmem:[#allocation8 + $0x3c] sm:$0xf]
    %v348 = vld [vmem:[%s6] sm:$0x1]
    %v350 = vlaneseq
    %v351 = vshrl.u32 %v350, 7
    %v352 = vsub.s32 0, %v351
    %v353 = vrot.slane %v348, %v352
    %v371 = vunpack.c.l.b16 %v332
    %v372 = vunpack.c.l.b16 %v333
    %v373 = vunpack.c.l.b16 %v334
    %v374 = vunpack.c.l.b16 %v335
    %v375 = vunpack.c.l.b16 %v336
    %v376 = vunpack.c.l.b16 %v337
    %v377 = vunpack.c.l.b16 %v338
    %v378 = vunpack.c.l.b16 %v339
    %v379 = vunpack.c.l.b16 %v340
    %v380 = vunpack.c.l.b16 %v341
    %v381 = vunpack.c.l.b16 %v342
    %v382 = vunpack.c.l.b16 %v343
    %v383 = vunpack.c.l.b16 %v344
    %v384 = vunpack.c.l.b16 %v345
    %v385 = vunpack.c.l.b16 %v346
    %v386 = vunpack.c.l.b16 %v347
    %v387 = vpack.c.b16 %v372, %v371
    %v388 = vpack.c.b16 %v374, %v373
    %v389 = vpack.c.b16 %v376, %v375
    %v390 = vpack.c.b16 %v378, %v377
    %v391 = vpack.c.b16 %v380, %v379
    %v392 = vpack.c.b16 %v382, %v381
    %v393 = vpack.c.b16 %v384, %v383
    %v394 = vpack.c.b16 %v386, %v385
    %403 = vmatprep.subr.bf16.mxu0 0
    %404 = vmatpush1.bf16.msra.mxu0 %v387
    %405 = vmatprep.subr.bf16.mxu0 0
    %406 = vmatpush1.bf16.msra.mxu0 %v388
    %407 = vmatprep.subr.bf16.mxu0 0
    %408 = vmatpush1.bf16.msra.mxu0 %v389
    %409 = vmatprep.subr.bf16.mxu0 0
    %410 = vmatpush1.bf16.msra.mxu0 %v390
    %411 = vmatprep.subr.bf16.mxu0 0
    %412 = vmatpush1.bf16.msra.mxu0 %v391
    %413 = vmatprep.subr.bf16.mxu0 0
    %414 = vmatpush1.bf16.msra.mxu0 %v392
    %415 = vmatprep.subr.bf16.mxu0 0
    %416 = vmatpush1.bf16.msra.mxu0 %v393
    %417 = vmatprep.subr.bf16.mxu0 0
    %418 = vmatpush1.bf16.msra.mxu0 %v394
    %419 = vmatprep.subr.bf16.mxu0 0
    %420 = vmatpush1.bf16.msra.mxu0 0
    %421 = vmatprep.subr.bf16.mxu0 0
    %422 = vmatpush1.bf16.msra.mxu0 0
    %423 = vmatprep.subr.bf16.mxu0 0
    %424 = vmatpush1.bf16.msra.mxu0 0
    %425 = vmatprep.subr.bf16.mxu0 0
    %426 = vmatpush1.bf16.msra.mxu0 0
    %427 = vmatprep.subr.bf16.mxu0 0
    %428 = vmatpush1.bf16.msra.mxu0 0
    %429 = vmatprep.subr.bf16.mxu0 0
    %430 = vmatpush1.bf16.msra.mxu0 0
    %431 = vmatprep.subr.bf16.mxu0 0
    %432 = vmatpush1.bf16.msra.mxu0 0
    %433 = vmatprep.subr.bf16.mxu0 0
    %434 = vmatpush1.bf16.msra.mxu0 0
    %435 = vmatprep.mubr.bf16.mxu0 0
    %436 = vmatmul.mubr.bf16.gmra.mrb[0].mxu0 %v331
    %v437 = vpop.f32.mrb[0].mxu0
    %v438 = vadd.f32 %v353, %v437
    %v439 = vpop.f32.mrb[0].mxu0
    %v440 = vpop.f32.mrb[0].mxu0
    %v441 = vadd.f32 %v353, %v440
    %v442 = vpop.f32.mrb[0].mxu0
    %443 = vdwg.mxu0
    %v444 = vsub.f32 0.0, %v438
    %v445 = vsub.f32 0.0, %v441
    %v446 = vmul.f32 %v444, 1.442695
    %v447 = vpow.pop %v446
    %v448 = vmul.f32 %v445, 1.442695
    %v449 = vpow.pop %v448
    %v450 = vadd.f32 %v447, 1.0
    %v451 = vadd.f32 %v449, 1.0
    %v452 = vrcp.pop %v450
    %v453 = vrcp.pop %v451
    %v454 = vpack.c.bf16 %v453, %v452
    %v456 = vunpack.c.l.b16 %v454
    %v457 = vunpack.c.h.b16 %v454
    %v458 = vpack.c.b16 %v456, %v456
    %v459 = vpack.c.b16 %v457, %v457
    %462 = vst [vmem:[#allocation10] sm:$0xf] %v458
    %463 = vst [vmem:[#allocation10 + $0x4] sm:$0xf] %v459
    // Predicated region
    $region46: #{tpu_custom_call.1} parent=1 // pred_check
      _
    $region47: #{tpu_custom_call.1} parent=1 // pred_check_branch
      %465 = sbr.rel (0) target = $region49
    $region48: #{tpu_custom_call.1} parent=1 // pred_region
      %s467 = ssub.s32 128, 128
      %468 = vsyncadd [#allocation4], %s467
      %s469 = sshll.u32 [#allocation10], 4
      %s470 = int_to_ptr.vmem [resolvable:$true] %s469
      %475 = dma.vmem_to_hbm [thread:$0]  %s470, 128, %s7, [#allocation4], 64, 64, 4
    $region49: #{tpu_custom_call.1} parent=1 // pred_fallthru
      _
    // Predicated region
    $region50: #{tpu_custom_call.1} parent=1 // pred_check
      _
    $region51: #{tpu_custom_call.1} parent=1 // pred_check_branch
      %477 = sbr.rel (0) target = $region53
    $region52: #{tpu_custom_call.1} parent=1 // pred_region
      %478 = dma.done [#allocation4], 128
    $region53: #{tpu_custom_call.1} parent=1 // pred_fallthru
      _
    %479 = vsyncpa [#allocation3], 1
    %480 = vsyncpa [#allocation6], 1
    %481 = vsyncpa [#allocation9], 1
    %482 = vsyncpa [#allocation4], 1

</llo_original>
